<compile_context>
chip_gen: v7x
topology: tpu7x:2x2x1
jax: 0.10.0
libtpu: 0.0.40
codegen_flags: <defaults>
</compile_context>

<pallas_src>
import jax
import jax.numpy as jnp
from jax.experimental import pallas as pl
from jax.experimental.pallas import tpu as pltpu

NZ = 32          # latent size (nz)
H1 = 512         # fc hidden
H2 = 1024        # fc2 output (= 1*32*32)
BN_EPS = 1e-5
LRELU_SLOPE = 0.01  # nn.LeakyReLU() default


def _d_kernel(z_ref, w1_ref, g_ref, beta_ref, w2_ref, b2_ref, o_ref):
    # ---- fc: Linear(nz, 512), bf16 operands -> f32 accumulation on the MXU.
    # fc1 bias intentionally omitted: it cancels exactly under the
    # training-mode BatchNorm that follows (mean subtraction removes it,
    # variance is shift-invariant).
    h = jnp.dot(z_ref[...], w1_ref[...],
                preferred_element_type=jnp.float32)          # (B, 512) f32

    # ---- BatchNorm1d(512), training mode (biased batch variance), affine
    #      folded into one FMA per element.
    mean = jnp.mean(h, axis=0, keepdims=True)                 # (1, 512)
    hc = h - mean
    var = jnp.mean(hc * hc, axis=0, keepdims=True)            # biased var
    scale = g_ref[...] * jax.lax.rsqrt(var + BN_EPS)          # (1, 512)
    h = hc * scale + beta_ref[...]

    # ---- LeakyReLU(0.01): single max (slope < 1 makes this exact).
    h = jnp.maximum(h, LRELU_SLOPE * h)

    # ---- fc2: Linear(512, 1024), bf16 operands, f32 accumulate.
    y = jnp.dot(h.astype(jnp.bfloat16), w2_ref[...],
                preferred_element_type=jnp.float32)           # (B, 1024)
    y = y + b2_ref[...]

    # ---- sigmoid: EUP exp + approx reciprocal (EUP slot, VALU stays free).
    o_ref[...] = pl.reciprocal(1.0 + jnp.exp(-y), approx=True)


def d_forward(z, params):
    """z: (B, NZ) float32. Returns (B, 1, 32, 32) float32."""
    w1t, b1, gamma, beta, w2t, b2 = params
    del b1  # mathematically a no-op before training-mode BatchNorm1d
    B = z.shape[0]

    # bf16 matmul operands (halves the dominant HBM weight traffic).
    z_bf = z.astype(jnp.bfloat16)
    w1_bf = w1t.astype(jnp.bfloat16)
    w2_bf = w2t.astype(jnp.bfloat16)

    full = lambda shape: pl.BlockSpec(shape, lambda: (0,) * len(shape))

    cost = pl.CostEstimate(
        flops=2 * B * (NZ * H1 + H1 * H2),
        transcendentals=B * H2,                    # exp in sigmoid
        bytes_accessed=(
            (NZ * H1 + H1 * H2) * 2                # bf16 weights
            + B * NZ * 2                           # bf16 z
            + (2 * H1 + H2) * 4                    # gamma, beta, b2 (f32)
            + B * H2 * 4                           # f32 output
        ),
    )

    y = pl.pallas_call(
        _d_kernel,
        out_shape=jax.ShapeDtypeStruct((B, H2), jnp.float32),
        grid=(),
        in_specs=[
            full((B, NZ)),      # z (bf16)
            full((NZ, H1)),     # W1^T (bf16)
            full((1, H1)),      # gamma
            full((1, H1)),      # beta
            full((H1, H2)),     # W2^T (bf16)
            full((1, H2)),      # b2
        ],
        out_specs=full((B, H2)),
        compiler_params=pltpu.CompilerParams(
            vmem_limit_bytes=32 * 1024 * 1024),
        cost_estimate=cost,
    )(z_bf, w1_bf, gamma, beta, w2_bf, b2)

    # glue: NCHW view, same as .view(-1, 1, 32, 32)
    return y.reshape(B, 1, 32, 32)


def d_forward_ref(z, params):
    """Pure-JAX f32 reference matching the PyTorch module exactly."""
    w1t, b1, gamma, beta, w2t, b2 = params
    h = z @ w1t + b1
    mean = jnp.mean(h, axis=0, keepdims=True)
    var = jnp.mean((h - mean) ** 2, axis=0, keepdims=True)
    h = (h - mean) * jax.lax.rsqrt(var + BN_EPS) * gamma + beta
    h = jnp.where(h >= 0, h, LRELU_SLOPE * h)
    y = jax.nn.sigmoid(h @ w2t + b2)
    return y.reshape(z.shape[0], 1, 32, 32)


def init_params(key):
    """Deterministic synthetic parameter init (shapes match the PyTorch module)."""
    k1, k2, k3, k4, k5, k6 = jax.random.split(key, 6)
    # nn.Linear(nz, 512): weight (512, nz) -> stored transposed (nz, 512)
    w1t = jax.random.normal(k1, (NZ, H1), jnp.float32) * 0.05
    b1 = jax.random.normal(k2, (1, H1), jnp.float32) * 0.05
    # BatchNorm1d(512) affine params
    gamma = 1.0 + 0.1 * jax.random.normal(k3, (1, H1), jnp.float32)
    beta = 0.1 * jax.random.normal(k4, (1, H1), jnp.float32)
    # nn.Linear(512, 1024): weight (1024, 512) -> stored transposed (512, 1024)
    w2t = jax.random.normal(k5, (H1, H2), jnp.float32) * 0.05
    b2 = jax.random.normal(k6, (1, H2), jnp.float32) * 0.05
    return (w1t, b1, gamma, beta, w2t, b2)


if __name__ == "__main__":
    key = jax.random.PRNGKey(0)
    kp, kz = jax.random.split(key)
    params = init_params(kp)

    B = 8  # small batch (BN training-mode stats need B > 1)
    z = jax.random.normal(kz, (B, NZ), jnp.float32)

    out = d_forward(z, params)
    out = jax.block_until_ready(out)

    assert out.shape == (B, 1, 32, 32), out.shape
    assert out.dtype == jnp.float32

    # sigmoid output range
    assert bool(jnp.all((out >= 0.0) & (out <= 1.0)))

    # correctness vs. pure-JAX f32 reference (tolerance covers bf16 matmul
    # operands + approx reciprocal)
    ref = d_forward_ref(z, params)
    assert bool(jnp.all(jnp.abs(out - ref) < 3e-2)), float(
        jnp.max(jnp.abs(out - ref)))

    print("KERNEL_OK")
</pallas_src>

<mosaic_0001>
module attributes {stable_mosaic.version = 11 : i64} {
  func.func @_d_kernel(%arg0: memref<8x32xbf16, #tpu.memory_space<vmem>>, %arg1: memref<32x512xbf16, #tpu.memory_space<vmem>>, %arg2: memref<1x512xf32, #tpu.memory_space<vmem>>, %arg3: memref<1x512xf32, #tpu.memory_space<vmem>>, %arg4: memref<512x1024xbf16, #tpu.memory_space<vmem>>, %arg5: memref<1x1024xf32, #tpu.memory_space<vmem>>, %arg6: memref<8x1024xf32, #tpu.memory_space<vmem>>) attributes {dimension_semantics = [], scalar_prefetch = 0 : i64, scratch_operands = 0 : i64, tpu.core_type = #tpu.core_type<tc>} {
    %c0 = arith.constant 0 : index
    %c0_0 = arith.constant 0 : index
    %0 = vector.load %arg0[%c0, %c0_0] : memref<8x32xbf16, #tpu.memory_space<vmem>>, vector<8x32xbf16>
    %c0_1 = arith.constant 0 : index
    %c0_2 = arith.constant 0 : index
    %1 = vector.load %arg1[%c0_1, %c0_2] : memref<32x512xbf16, #tpu.memory_space<vmem>>, vector<32x512xbf16>
    %cst = arith.constant dense<0.000000e+00> : vector<8x512xf32>
    %2 = tpu.matmul %0, %1, %cst {dimension_numbers = #tpu.dot_dimension_numbers<[1], [0], [0], [1], [0, 0, 1, 1], [], []>} : vector<8x32xbf16>, vector<32x512xbf16>, vector<8x512xf32> -> vector<8x512xf32>
    %cst_3 = arith.constant dense<0.000000e+00> : vector<512xf32>
    %3 = vector.multi_reduction <add>, %2, %cst_3 [0] : vector<8x512xf32> to vector<512xf32>
    %4 = vector.shape_cast %3 : vector<512xf32> to vector<1x512xf32>
    %cst_4 = arith.constant 8.000000e+00 : f32
    %5 = vector.broadcast %cst_4 : f32 to vector<1x512xf32>
    %6 = arith.divf %4, %5 : vector<1x512xf32>
    %7 = vector.broadcast %6 : vector<1x512xf32> to vector<8x512xf32>
    %8 = arith.subf %2, %7 : vector<8x512xf32>
    %9 = arith.mulf %8, %8 : vector<8x512xf32>
    %cst_5 = arith.constant dense<0.000000e+00> : vector<512xf32>
    %10 = vector.multi_reduction <add>, %9, %cst_5 [0] : vector<8x512xf32> to vector<512xf32>
    %11 = vector.shape_cast %10 : vector<512xf32> to vector<1x512xf32>
    %cst_6 = arith.constant 8.000000e+00 : f32
    %12 = vector.broadcast %cst_6 : f32 to vector<1x512xf32>
    %13 = arith.divf %11, %12 : vector<1x512xf32>
    %c0_7 = arith.constant 0 : index
    %c0_8 = arith.constant 0 : index
    %14 = vector.load %arg2[%c0_7, %c0_8] : memref<1x512xf32, #tpu.memory_space<vmem>>, vector<1x512xf32>
    %cst_9 = arith.constant 9.99999974E-6 : f32
    %15 = vector.broadcast %cst_9 : f32 to vector<1x512xf32>
    %16 = arith.addf %13, %15 : vector<1x512xf32>
    %17 = math.rsqrt %16 : vector<1x512xf32>
    %18 = arith.mulf %14, %17 : vector<1x512xf32>
    %19 = vector.broadcast %18 : vector<1x512xf32> to vector<8x512xf32>
    %20 = arith.mulf %8, %19 : vector<8x512xf32>
    %c0_10 = arith.constant 0 : index
    %c0_11 = arith.constant 0 : index
    %21 = vector.load %arg3[%c0_10, %c0_11] : memref<1x512xf32, #tpu.memory_space<vmem>>, vector<1x512xf32>
    %22 = vector.broadcast %21 : vector<1x512xf32> to vector<8x512xf32>
    %23 = arith.addf %20, %22 : vector<8x512xf32>
    %cst_12 = arith.constant 0.00999999977 : f32
    %24 = vector.broadcast %cst_12 : f32 to vector<8x512xf32>
    %25 = arith.mulf %24, %23 : vector<8x512xf32>
    %26 = arith.maximumf %23, %25 : vector<8x512xf32>
    %27 = arith.truncf %26 : vector<8x512xf32> to vector<8x512xbf16>
    %c0_13 = arith.constant 0 : index
    %c0_14 = arith.constant 0 : index
    %28 = vector.load %arg4[%c0_13, %c0_14] : memref<512x1024xbf16, #tpu.memory_space<vmem>>, vector<512x1024xbf16>
    %cst_15 = arith.constant dense<0.000000e+00> : vector<8x1024xf32>
    %29 = tpu.matmul %27, %28, %cst_15 {dimension_numbers = #tpu.dot_dimension_numbers<[1], [0], [0], [1], [0, 0, 1, 1], [], []>} : vector<8x512xbf16>, vector<512x1024xbf16>, vector<8x1024xf32> -> vector<8x1024xf32>
    %c0_16 = arith.constant 0 : index
    %c0_17 = arith.constant 0 : index
    %30 = vector.load %arg5[%c0_16, %c0_17] : memref<1x1024xf32, #tpu.memory_space<vmem>>, vector<1x1024xf32>
    %31 = vector.broadcast %30 : vector<1x1024xf32> to vector<8x1024xf32>
    %32 = arith.addf %29, %31 : vector<8x1024xf32>
    %cst_18 = arith.constant 0.000000e+00 : f32
    %33 = vector.broadcast %cst_18 : f32 to vector<8x1024xf32>
    %34 = arith.subf %33, %32 : vector<8x1024xf32>
    %35 = math.exp %34 : vector<8x1024xf32>
    %cst_19 = arith.constant 1.000000e+00 : f32
    %36 = vector.broadcast %cst_19 : f32 to vector<8x1024xf32>
    %37 = arith.addf %36, %35 : vector<8x1024xf32>
    %38 = tpu.reciprocal %37 {approx = true} : vector<8x1024xf32> -> vector<8x1024xf32>
    %c0_20 = arith.constant 0 : index
    %c0_21 = arith.constant 0 : index
    %39 = vector.load %arg6[%c0_20, %c0_21] : memref<8x1024xf32, #tpu.memory_space<vmem>>, vector<8x1024xf32>
    tpu.vector_store %arg6[%c0_20, %c0_21], %38 {strides = array<i32>} : memref<8x1024xf32, #tpu.memory_space<vmem>>, vector<8x1024xf32>,
    return
  }
}

</mosaic_0001>

<llo_original>
// kernel: tpu_custom_call.1
$region0: #{tpu_custom_call.1}
  #allocation0 [shape = 'u32[]', space=smem, size = 0x4, offset = 0x4, fixed_abs, tag = 'smem constant byte address 0x4 - core index']
  #allocation1 [shape = 'u32[144,128]{1,0:T(1,128)}', space=vmem, size = 0x12000, scoped, tag = 'internal scratch']
  %s0 = inlined_call_operand.hbm [shape: bf16[8,32], index: 0, kind: input, shape index: {}]
  %s1 = inlined_call_operand.hbm [shape: bf16[32,512], index: 1, kind: input, shape index: {}]
  %s2 = inlined_call_operand.vmem [shape: f32[1,512], index: 2, kind: input, shape index: {}]
  %s3 = inlined_call_operand.hbm [shape: f32[1,512], index: 3, kind: input, shape index: {}]
  %s4 = inlined_call_operand.hbm [shape: bf16[512,1024], index: 4, kind: input, shape index: {}]
  %s5 = inlined_call_operand.vmem [shape: f32[1,1024], index: 5, kind: input, shape index: {}]
  %s6 = inlined_call_operand.hbm [shape: f32[8,1024], index: 6, kind: output, shape index: {}]
  %s7 = sld [smem:[#allocation0]]
  $region50: #{tpu_custom_call.1} parent=0
    _
  %s9 = ssub.s32 1, %s7
  %s10 = scalar_select 0, %s9, %s7
  $region1: #{tpu_custom_call.1} parent=0
    #allocation2 [shape = 'u8[2048]{0}', space=vmem, size = 0x800, scoped, tag = 'input window, operand 0, single buffered']
    #allocation3 [shape = 's32[1]{0}', space=sflag, size = 0x4, scoped, tag = 'scoped memory for tpu_custom_call.1']
    #allocation4 [shape = 's32[1]{0}', space=sflag, size = 0x4, scoped, tag = 'scoped memory for tpu_custom_call.1']
    #allocation5 [shape = 'u8[32768]{0}', space=vmem, size = 0x8000, scoped, tag = 'input window, operand 1, single buffered']
    #allocation6 [shape = 's32[1]{0}', space=sflag, size = 0x4, scoped, tag = 'scoped memory for tpu_custom_call.1']
    #allocation7 [shape = 'u8[2048]{0}', space=vmem, size = 0x800, scoped, tag = 'input window, operand 3, single buffered']
    #allocation8 [shape = 'u8[1048576]{0}', space=vmem, size = 0x100000, scoped, tag = 'input window, operand 4, single buffered']
    #allocation9 [shape = 's32[1]{0}', space=sflag, size = 0x4, scoped, tag = 'scoped memory for tpu_custom_call.1']
    #allocation10 [shape = 'u8[32768]{0}', space=vmem, size = 0x8000, scoped, tag = 'output window, operand 0, single buffered']
    %11 = vsyncpa [#allocation3], 0
    %12 = vsyncpa [#allocation6], 0
    %13 = vsyncpa [#allocation9], 0
    %14 = vsyncpa [#allocation4], 0
    // Predicated region
    $region2: #{tpu_custom_call.1} parent=1 // pred_check
      _
    $region3: #{tpu_custom_call.1} parent=1 // pred_check_branch
      %16 = sbr.rel (0) target = $region5
    $region4: #{tpu_custom_call.1} parent=1 // pred_region
      %s18 = ssub.s32 64, 64
      %19 = vsyncadd [#allocation3], %s18
      %s21 = sshll.u32 [#allocation2], 4
      %s22 = int_to_ptr.vmem [resolvable:$true] %s21
      %24 = dma.hbm_to_vmem [thread:$0]  %s0, 64, %s22, [#allocation3]
    $region5: #{tpu_custom_call.1} parent=1 // pred_fallthru
      _
    // Predicated region
    $region6: #{tpu_custom_call.1} parent=1 // pred_check
      _
    $region7: #{tpu_custom_call.1} parent=1 // pred_check_branch
      %26 = sbr.rel (0) target = $region9
    $region8: #{tpu_custom_call.1} parent=1 // pred_region
      %s28 = ssub.s32 1024, 1024
      %29 = vsyncadd [#allocation6], %s28
      %s30 = sshll.u32 [#allocation5], 4
      %s31 = int_to_ptr.vmem [resolvable:$true] %s30
      %36 = dma.hbm_to_vmem [thread:$0]  %s1, 1024, %s31, [#allocation6], 256, 256, 16
    $region9: #{tpu_custom_call.1} parent=1 // pred_fallthru
      _
    // Predicated region
    $region10: #{tpu_custom_call.1} parent=1 // pred_check
      _
    $region11: #{tpu_custom_call.1} parent=1 // pred_check_branch
      %38 = sbr.rel (0) target = $region13
    $region12: #{tpu_custom_call.1} parent=1 // pred_region
      _
    $region13: #{tpu_custom_call.1} parent=1 // pred_fallthru
      _
    // Predicated region
    $region14: #{tpu_custom_call.1} parent=1 // pred_check
      _
    $region15: #{tpu_custom_call.1} parent=1 // pred_check_branch
      %40 = sbr.rel (0) target = $region17
    $region16: #{tpu_custom_call.1} parent=1 // pred_region
      %s42 = ssub.s32 64, 64
      %43 = vsyncadd [#allocation6], %s42
      %s45 = sshll.u32 [#allocation7], 4
      %s46 = int_to_ptr.vmem [resolvable:$true] %s45
      %48 = dma.hbm_to_vmem [thread:$0]  %s3, 64, %s46, [#allocation6]
    $region17: #{tpu_custom_call.1} parent=1 // pred_fallthru
      _
    // Predicated region
    $region18: #{tpu_custom_call.1} parent=1 // pred_check
      _
    $region19: #{tpu_custom_call.1} parent=1 // pred_check_branch
      %50 = sbr.rel (0) target = $region21
    $region20: #{tpu_custom_call.1} parent=1 // pred_region
      %s52 = ssub.s32 32768, 32768
      %53 = vsyncadd [#allocation9], %s52
      %s54 = sshll.u32 [#allocation8], 4
      %s55 = int_to_ptr.vmem [resolvable:$true] %s54
      %60 = dma.hbm_to_vmem [thread:$0]  %s4, 32768, %s55, [#allocation9], 512, 512, 32
    $region21: #{tpu_custom_call.1} parent=1 // pred_fallthru
      _
    // Predicated region
    $region22: #{tpu_custom_call.1} parent=1 // pred_check
      _
    $region23: #{tpu_custom_call.1} parent=1 // pred_check_branch
      %62 = sbr.rel (0) target = $region25
    $region24: #{tpu_custom_call.1} parent=1 // pred_region
      _
    $region25: #{tpu_custom_call.1} parent=1 // pred_fallthru
      _
    // Predicated region
    $region26: #{tpu_custom_call.1} parent=1 // pred_check
      _
    $region27: #{tpu_custom_call.1} parent=1 // pred_check_branch
      %64 = sbr.rel (0) target = $region29
    $region28: #{tpu_custom_call.1} parent=1 // pred_region
      %65 = dma.done [#allocation3], 64
    $region29: #{tpu_custom_call.1} parent=1 // pred_fallthru
      _
    // Predicated region
    $region30: #{tpu_custom_call.1} parent=1 // pred_check
      _
    $region31: #{tpu_custom_call.1} parent=1 // pred_check_branch
      %67 = sbr.rel (0) target = $region33
    $region32: #{tpu_custom_call.1} parent=1 // pred_region
      %68 = dma.done [#allocation6], 1024
    $region33: #{tpu_custom_call.1} parent=1 // pred_fallthru
      _
    // Predicated region
    $region34: #{tpu_custom_call.1} parent=1 // pred_check
      _
    $region35: #{tpu_custom_call.1} parent=1 // pred_check_branch
      %70 = sbr.rel (0) target = $region37
    $region36: #{tpu_custom_call.1} parent=1 // pred_region
      %71 = dma.done [#allocation6], 64
    $region37: #{tpu_custom_call.1} parent=1 // pred_fallthru
      _
    // Predicated region
    $region38: #{tpu_custom_call.1} parent=1 // pred_check
      _
    $region39: #{tpu_custom_call.1} parent=1 // pred_check_branch
      %73 = sbr.rel (0) target = $region41
    $region40: #{tpu_custom_call.1} parent=1 // pred_region
      %74 = dma.done [#allocation9], 32768
    $region41: #{tpu_custom_call.1} parent=1 // pred_fallthru
      _
    %v76 = vld [vmem:[#allocation2] sm:$0xf]
    %v77 = vld [vmem:[#allocation5] sm:$0xff]
    %v78 = vld [vmem:[#allocation5 + $0x8] sm:$0xff]
    %v79 = vld [vmem:[#allocation5 + $0x10] sm:$0xff]
    %v80 = vld [vmem:[#allocation5 + $0x18] sm:$0xff]
    %v81 = vld [vmem:[#allocation5 + $0x20] sm:$0xff]
    %v82 = vld [vmem:[#allocation5 + $0x28] sm:$0xff]
    %v83 = vld [vmem:[#allocation5 + $0x30] sm:$0xff]
    %v84 = vld [vmem:[#allocation5 + $0x38] sm:$0xff]
    %v93 = vunpack.c.l.b16 %v77
    %v94 = vunpack.c.h.b16 %v77
    %v95 = vunpack.c.l.b16 %v78
    %v96 = vunpack.c.h.b16 %v78
    %v97 = vunpack.c.l.b16 %v79
    %v98 = vunpack.c.h.b16 %v79
    %v99 = vunpack.c.l.b16 %v80
    %v100 = vunpack.c.h.b16 %v80
    %v101 = vunpack.c.l.b16 %v81
    %v102 = vunpack.c.h.b16 %v81
    %v103 = vunpack.c.l.b16 %v82
    %v104 = vunpack.c.h.b16 %v82
    %v105 = vunpack.c.l.b16 %v83
    %v106 = vunpack.c.h.b16 %v83
    %v107 = vunpack.c.l.b16 %v84
    %v108 = vunpack.c.h.b16 %v84
    %v109 = vpack.c.b16 %v97, %v93
    %v110 = vpack.c.b16 %v98, %v94
    %v111 = vpack.c.b16 %v99, %v95
    %v112 = vpack.c.b16 %v100, %v96
    %v113 = vpack.c.b16 %v105, %v101
    %v114 = vpack.c.b16 %v106, %v102
    %v115 = vpack.c.b16 %v107, %v103
    %v116 = vpack.c.b16 %v108, %v104
    %vm125 = vcmask 261120
    %v127 = vsel %vm125, %v76, 0
    %129 = vmatprep.subr.bf16.mxu0 %v110
    %130 = vmatpush1.bf16.msra.mxu0 %v109
    %131 = vmatprep.subr.bf16.mxu0 %v114
    %132 = vmatpush1.bf16.msra.mxu0 %v113
    %133 = vmatprep.subr.bf16.mxu0 0
    %134 = vmatpush1.bf16.msra.mxu0 0
    %135 = vmatprep.subr.bf16.mxu0 0
    %136 = vmatpush1.bf16.msra.mxu0 0
    %137 = vmatprep.subr.bf16.mxu0 0
    %138 = vmatpush1.bf16.msra.mxu0 0
    %139 = vmatprep.subr.bf16.mxu0 0
    %140 = vmatpush1.bf16.msra.mxu0 0
    %141 = vmatprep.subr.bf16.mxu0 0
    %142 = vmatpush1.bf16.msra.mxu0 0
    %143 = vmatprep.subr.bf16.mxu0 0
    %144 = vmatpush1.bf16.msra.mxu0 0
    %145 = vmatprep.subr.bf16.mxu0 0
    %146 = vmatpush1.bf16.msra.mxu0 0
    %147 = vmatprep.subr.bf16.mxu0 0
    %148 = vmatpush1.bf16.msra.mxu0 0
    %149 = vmatprep.subr.bf16.mxu0 0
    %150 = vmatpush1.bf16.msra.mxu0 0
    %151 = vmatprep.subr.bf16.mxu0 0
    %152 = vmatpush1.bf16.msra.mxu0 0
    %153 = vmatprep.subr.bf16.mxu0 0
    %154 = vmatpush1.bf16.msra.mxu0 0
    %155 = vmatprep.subr.bf16.mxu0 0
    %156 = vmatpush1.bf16.msra.mxu0 0
    %157 = vmatprep.subr.bf16.mxu0 0
    %158 = vmatpush1.bf16.msra.mxu0 0
    %159 = vmatprep.subr.bf16.mxu0 0
    %160 = vmatpush1.bf16.msra.mxu0 0
    %161 = vmatprep.mubr.bf16.mxu0 0
    %162 = vmatmul.mubr.bf16.gmra.mrb[0].mxu0 %v127
    %v163 = vpop.f32.mrb[0].mxu0
    %v164 = vadd.f32 0.0, %v163
    %v165 = vpop.f32.mrb[0].mxu0
    %v166 = vadd.f32 0.0, %v165
    %v167 = vpop.f32.mrb[0].mxu0
    %v168 = vpop.f32.mrb[0].mxu0
    %169 = vdwg.mxu0
    %170 = vmatprep.subr.bf16.mxu0 %v112
    %171 = vmatpush1.bf16.msra.mxu0 %v111
    %172 = vmatprep.subr.bf16.mxu0 %v116
    %173 = vmatpush1.bf16.msra.mxu0 %v115
    %174 = vmatprep.subr.bf16.mxu0 0
    %175 = vmatpush1.bf16.msra.mxu0 0
    %176 = vmatprep.subr.bf16.mxu0 0
    %177 = vmatpush1.bf16.msra.mxu0 0
    %178 = vmatprep.subr.bf16.mxu0 0
    %179 = vmatpush1.bf16.msra.mxu0 0
    %180 = vmatprep.subr.bf16.mxu0 0
    %181 = vmatpush1.bf16.msra.mxu0 0
    %182 = vmatprep.subr.bf16.mxu0 0
    %183 = vmatpush1.bf16.msra.mxu0 0
    %184 = vmatprep.subr.bf16.mxu0 0
    %185 = vmatpush1.bf16.msra.mxu0 0
    %186 = vmatprep.subr.bf16.mxu0 0
    %187 = vmatpush1.bf16.msra.mxu0 0
    %188 = vmatprep.subr.bf16.mxu0 0
    %189 = vmatpush1.bf16.msra.mxu0 0
    %190 = vmatprep.subr.bf16.mxu0 0
    %191 = vmatpush1.bf16.msra.mxu0 0
    %192 = vmatprep.subr.bf16.mxu0 0
    %193 = vmatpush1.bf16.msra.mxu0 0
    %194 = vmatprep.subr.bf16.mxu0 0
    %195 = vmatpush1.bf16.msra.mxu0 0
    %196 = vmatprep.subr.bf16.mxu0 0
    %197 = vmatpush1.bf16.msra.mxu0 0
    %198 = vmatprep.subr.bf16.mxu0 0
    %199 = vmatpush1.bf16.msra.mxu0 0
    %200 = vmatprep.subr.bf16.mxu0 0
    %201 = vmatpush1.bf16.msra.mxu0 0
    %202 = vmatprep.mubr.bf16.mxu0 0
    %203 = vmatmul.mubr.bf16.gmra.mrb[0].mxu0 %v127
    %v204 = vpop.f32.mrb[0].mxu0
    %v205 = vadd.f32 0.0, %v204
    %v206 = vpop.f32.mrb[0].mxu0
    %v207 = vadd.f32 0.0, %v206
    %v208 = vpop.f32.mrb[0].mxu0
    %v209 = vpop.f32.mrb[0].mxu0
    %210 = vdwg.mxu0
    %v211 = vrot.slane %v164, 4
    %v212 = vadd.f32 %v164, %v211
    %v213 = vrot.slane %v212, 2
    %v214 = vadd.f32 %v212, %v213
    %v215 = vrot.slane %v214, 1
    %v216 = vadd.f32 %v214, %v215
    %v217 = vrot.slane %v166, 4
    %v218 = vadd.f32 %v166, %v217
    %v219 = vrot.slane %v218, 2
    %v220 = vadd.f32 %v218, %v219
    %v221 = vrot.slane %v220, 1
    %v222 = vadd.f32 %v220, %v221
    %v223 = vrot.slane %v205, 4
    %v224 = vadd.f32 %v205, %v223
    %v225 = vrot.slane %v224, 2
    %v226 = vadd.f32 %v224, %v225
    %v227 = vrot.slane %v226, 1
    %v228 = vadd.f32 %v226, %v227
    %v229 = vrot.slane %v207, 4
    %v230 = vadd.f32 %v207, %v229
    %v231 = vrot.slane %v230, 2
    %v232 = vadd.f32 %v230, %v231
    %v233 = vrot.slane %v232, 1
    %v234 = vadd.f32 %v232, %v233
    %v235 = vrcp.pop 8.0
    %v236 = vmul.f32 %v216, %v235
    %v237 = vmul.f32 %v222, %v235
    %v238 = vmul.f32 %v228, %v235
    %v239 = vmul.f32 %v234, %v235
    %v240 = vsub.f32 %v164, %v236
    %v241 = vsub.f32 %v166, %v237
    %v242 = vsub.f32 %v205, %v238
    %v243 = vsub.f32 %v207, %v239
    %v244 = vmul.f32 %v240, %v240
    %v245 = vmul.f32 %v241, %v241
    %v246 = vmul.f32 %v242, %v242
    %v247 = vmul.f32 %v243, %v243
    %v248 = vrot.slane %v244, 4
    %v249 = vadd.f32 %v244, %v248
    %v250 = vrot.slane %v249, 2
    %v251 = vadd.f32 %v249, %v250
    %v252 = vrot.slane %v251, 1
    %v253 = vadd.f32 %v251, %v252
    %v254 = vrot.slane %v245, 4
    %v255 = vadd.f32 %v245, %v254
    %v256 = vrot.slane %v255, 2
    %v257 = vadd.f32 %v255, %v256
    %v258 = vrot.slane %v257, 1
    %v259 = vadd.f32 %v257, %v258
    %v260 = vrot.slane %v246, 4
    %v261 = vadd.f32 %v246, %v260
    %v262 = vrot.slane %v261, 2
    %v263 = vadd.f32 %v261, %v262
    %v264 = vrot.slane %v263, 1
    %v265 = vadd.f32 %v263, %v264
    %v266 = vrot.slane %v247, 4
    %v267 = vadd.f32 %v247, %v266
    %v268 = vrot.slane %v267, 2
    %v269 = vadd.f32 %v267, %v268
    %v270 = vrot.slane %v269, 1
    %v271 = vadd.f32 %v269, %v270
    %v272 = vmul.f32 %v253, %v235
    %v273 = vmul.f32 %v259, %v235
    %v274 = vmul.f32 %v265, %v235
    %v275 = vmul.f32 %v271, %v235
    %v276 = vld [vmem:[%s2] sm:$0xf]
    %v277 = vadd.f32 %v272, 1e-05
    %v278 = vadd.f32 %v273, 1e-05
    %v279 = vadd.f32 %v274, 1e-05
    %v280 = vadd.f32 %v275, 1e-05
    %v281 = vrsqrt.pop %v277
    %v282 = vrsqrt.pop %v278
    %v283 = vrsqrt.pop %v279
    %v284 = vrsqrt.pop %v280
    %v289 = vcombine.low %v281, %v282
    %v290 = vcombine.low %v283, %v284
    %v292 = vunpack.c.l.s4 1966171168
    %v293 = vunpack.c.0.s8 %v292
    %v294 = vlaneseq
    %v295 = vshrl.u32 %v294, 7
    %v296 = vsub.s32 %v293, %v295
    %v297 = vrot.slane %v289, %v296
    %v299 = vunpack.c.l.s4 1966171168
    %v300 = vunpack.c.0.s8 %v299
    %v301 = vlaneseq
    %v302 = vshrl.u32 %v301, 7
    %v303 = vsub.s32 %v300, %v302
    %v304 = vrot.slane %v290, %v303
    %v305 = vcombine.low %v297, %v304
    %v307 = vunpack.c.l.s4 1966171168
    %v308 = vunpack.c.0.s8 %v307
    %v309 = vlaneseq
    %v310 = vshrl.u32 %v309, 7
    %v311 = vsub.s32 %v308, %v310
    %v312 = vrot.slane %v305, %v311
    %v314 = vmul.f32 %v276, %v312
    %v316 = vlaneseq
    %v317 = vshrl.u32 %v316, 7
    %v318 = vsub.s32 0, %v317
    %v319 = vrot.slane %v314, %v318
    %v320 = vlaneseq
    %v321 = vshrl.u32 %v320, 7
    %v322 = vsub.s32 1, %v321
    %v323 = vrot.slane %v314, %v322
    %v324 = vlaneseq
    %v325 = vshrl.u32 %v324, 7
    %v326 = vsub.s32 2, %v325
    %v327 = vrot.slane %v314, %v326
    %v328 = vlaneseq
    %v329 = vshrl.u32 %v328, 7
    %v330 = vsub.s32 3, %v329
    %v331 = vrot.slane %v314, %v330
    %v336 = vmul.f32 %v240, %v319
    %v337 = vmul.f32 %v241, %v323
    %v338 = vmul.f32 %v242, %v327
    %v339 = vmul.f32 %v243, %v331
    %v340 = vld [vmem:[#allocation7] sm:$0xf]
    %v342 = vlaneseq
    %v343 = vshrl.u32 %v342, 7
    %v344 = vsub.s32 0, %v343
    %v345 = vrot.slane %v340, %v344
    %v346 = vlaneseq
    %v347 = vshrl.u32 %v346, 7
    %v348 = vsub.s32 1, %v347
    %v349 = vrot.slane %v340, %v348
    %v350 = vlaneseq
    %v351 = vshrl.u32 %v350, 7
    %v352 = vsub.s32 2, %v351
    %v353 = vrot.slane %v340, %v352
    %v354 = vlaneseq
    %v355 = vshrl.u32 %v354, 7
    %v356 = vsub.s32 3, %v355
    %v357 = vrot.slane %v340, %v356
    %v362 = vadd.f32 %v336, %v345
    %v363 = vadd.f32 %v337, %v349
    %v364 = vadd.f32 %v338, %v353
    %v365 = vadd.f32 %v339, %v357
    %v366 = vmul.f32 %v362, 0.01
    %v367 = vmul.f32 %v363, 0.01
    %v368 = vmul.f32 %v364, 0.01
    %v369 = vmul.f32 %v365, 0.01
    %v370 = vmax.f32 %v362, %v366
    %v371 = vmax.f32 %v363, %v367
    %v372 = vmax.f32 %v364, %v368
    %v373 = vmax.f32 %v365, %v369
    %v374 = vpack.c.bf16 %v370, %v370
    %v375 = vpack.c.bf16 %v371, %v371
    %v376 = vpack.c.bf16 %v372, %v372
    %v377 = vpack.c.bf16 %v373, %v373
    %v378 = vld [vmem:[#allocation8] sm:$0xff]
    %v379 = vld [vmem:[#allocation8 + $0x8] sm:$0xff]
    %v380 = vld [vmem:[#allocation8 + $0x10] sm:$0xff]
    %v381 = vld [vmem:[#allocation8 + $0x18] sm:$0xff]
    %v382 = vld [vmem:[#allocation8 + $0x20] sm:$0xff]
    %v383 = vld [vmem:[#allocation8 + $0x28] sm:$0xff]
    %v384 = vld [vmem:[#allocation8 + $0x30] sm:$0xff]
    %v385 = vld [vmem:[#allocation8 + $0x38] sm:$0xff]
    %v386 = vld [vmem:[#allocation8 + $0x40] sm:$0xff]
    %v387 = vld [vmem:[#allocation8 + $0x48] sm:$0xff]
    %v388 = vld [vmem:[#allocation8 + $0x50] sm:$0xff]
    %v389 = vld [vmem:[#allocation8 + $0x58] sm:$0xff]
    %v390 = vld [vmem:[#allocation8 + $0x60] sm:$0xff]
    %v391 = vld [vmem:[#allocation8 + $0x68] sm:$0xff]
    %v392 = vld [vmem:[#allocation8 + $0x70] sm:$0xff]
    %v393 = vld [vmem:[#allocation8 + $0x78] sm:$0xff]
    %v394 = vld [vmem:[#allocation8 + $0x80] sm:$0xff]
    %v395 = vld [vmem:[#allocation8 + $0x88] sm:$0xff]
    %v396 = vld [vmem:[#allocation8 + $0x90] sm:$0xff]
    %v397 = vld [vmem:[#allocation8 + $0x98] sm:$0xff]
    %v398 = vld [vmem:[#allocation8 + $0xa0] sm:$0xff]
    %v399 = vld [vmem:[#allocation8 + $0xa8] sm:$0xff]
    %v400 = vld [vmem:[#allocation8 + $0xb0] sm:$0xff]
    %v401 = vld [vmem:[#allocation8 + $0xb8] sm:$0xff]
    %v402 = vld [vmem:[#allocation8 + $0xc0] sm:$0xff]
    %v403 = vld [vmem:[#allocation8 + $0xc8] sm:$0xff]
    %v404 = vld [vmem:[#allocation8 + $0xd0] sm:$0xff]
    %v405 = vld [vmem:[#allocation8 + $0xd8] sm:$0xff]
    %v406 = vld [vmem:[#allocation8 + $0xe0] sm:$0xff]
    %v407 = vld [vmem:[#allocation8 + $0xe8] sm:$0xff]
    %v408 = vld [vmem:[#allocation8 + $0xf0] sm:$0xff]
    %v409 = vld [vmem:[#allocation8 + $0xf8] sm:$0xff]
    %v410 = vld [vmem:[#allocation8 + $0x100] sm:$0xff]
    %v411 = vld [vmem:[#allocation8 + $0x108] sm:$0xff]
    %v412 = vld [vmem:[#allocation8 + $0x110] sm:$0xff]
    %v413 = vld [vmem:[#allocation8 + $0x118] sm:$0xff]
    %v414 = vld [vmem:[#allocation8 + $0x120] sm:$0xff]
    %v415 = vld [vmem:[#allocation8 + $0x128] sm:$0xff]
    %v416 = vld [vmem:[#allocation8 + $0x130] sm:$0xff]
    %v417 = vld [vmem:[#allocation8 + $0x138] sm:$0xff]
    %v418 = vld [vmem:[#allocation8 + $0x140] sm:$0xff]
    %v419 = vld [vmem:[#allocation8 + $0x148] sm:$0xff]
    %v420 = vld [vmem:[#allocation8 + $0x150] sm:$0xff]
    %v421 = vld [vmem:[#allocation8 + $0x158] sm:$0xff]
    %v422 = vld [vmem:[#allocation8 + $0x160] sm:$0xff]
    %v423 = vld [vmem:[#allocation8 + $0x168] sm:$0xff]
    %v424 = vld [vmem:[#allocation8 + $0x170] sm:$0xff]
    %v425 = vld [vmem:[#allocation8 + $0x178] sm:$0xff]
    %v426 = vld [vmem:[#allocation8 + $0x180] sm:$0xff]
    %v427 = vld [vmem:[#allocation8 + $0x188] sm:$0xff]
    %v428 = vld [vmem:[#allocation8 + $0x190] sm:$0xff]
    %v429 = vld [vmem:[#allocation8 + $0x198] sm:$0xff]
    %v430 = vld [vmem:[#allocation8 + $0x1a0] sm:$0xff]
    %v431 = vld [vmem:[#allocation8 + $0x1a8] sm:$0xff]
    %v432 = vld [vmem:[#allocation8 + $0x1b0] sm:$0xff]
    %v433 = vld [vmem:[#allocation8 + $0x1b8] sm:$0xff]
    %v434 = vld [vmem:[#allocation8 + $0x1c0] sm:$0xff]
    %v435 = vld [vmem:[#allocation8 + $0x1c8] sm:$0xff]
    %v436 = vld [vmem:[#allocation8 + $0x1d0] sm:$0xff]
    %v437 = vld [vmem:[#allocation8 + $0x1d8] sm:$0xff]
    %v438 = vld [vmem:[#allocation8 + $0x1e0] sm:$0xff]
    %v439 = vld [vmem:[#allocation8 + $0x1e8] sm:$0xff]
    %v440 = vld [vmem:[#allocation8 + $0x1f0] sm:$0xff]
    %v441 = vld [vmem:[#allocation8 + $0x1f8] sm:$0xff]
    %v442 = vld [vmem:[#allocation8 + $0x200] sm:$0xff]
    %v443 = vld [vmem:[#allocation8 + $0x208] sm:$0xff]
    %v444 = vld [vmem:[#allocation8 + $0x210] sm:$0xff]
    %v445 = vld [vmem:[#allocation8 + $0x218] sm:$0xff]
    %v446 = vld [vmem:[#allocation8 + $0x220] sm:$0xff]
    %v447 = vld [vmem:[#allocation8 + $0x228] sm:$0xff]
    %v448 = vld [vmem:[#allocation8 + $0x230] sm:$0xff]
    %v449 = vld [vmem:[#allocation8 + $0x238] sm:$0xff]
    %v450 = vld [vmem:[#allocation8 + $0x240] sm:$0xff]
    %v451 = vld [vmem:[#allocation8 + $0x248] sm:$0xff]
    %v452 = vld [vmem:[#allocation8 + $0x250] sm:$0xff]
    %v453 = vld [vmem:[#allocation8 + $0x258] sm:$0xff]
    %v454 = vld [vmem:[#allocation8 + $0x260] sm:$0xff]
    %v455 = vld [vmem:[#allocation8 + $0x268] sm:$0xff]
    %v456 = vld [vmem:[#allocation8 + $0x270] sm:$0xff]
    %v457 = vld [vmem:[#allocation8 + $0x278] sm:$0xff]
    %v458 = vld [vmem:[#allocation8 + $0x280] sm:$0xff]
    %v459 = vld [vmem:[#allocation8 + $0x288] sm:$0xff]
    %v460 = vld [vmem:[#allocation8 + $0x290] sm:$0xff]
    %v461 = vld [vmem:[#allocation8 + $0x298] sm:$0xff]
    %v462 = vld [vmem:[#allocation8 + $0x2a0] sm:$0xff]
    %v463 = vld [vmem:[#allocation8 + $0x2a8] sm:$0xff]
    %v464 = vld [vmem:[#allocation8 + $0x2b0] sm:$0xff]
    %v465 = vld [vmem:[#allocation8 + $0x2b8] sm:$0xff]
    %v466 = vld [vmem:[#allocation8 + $0x2c0] sm:$0xff]
    %v467 = vld [vmem:[#allocation8 + $0x2c8] sm:$0xff]
    %v468 = vld [vmem:[#allocation8 + $0x2d0] sm:$0xff]
    %v469 = vld [vmem:[#allocation8 + $0x2d8] sm:$0xff]
    %v470 = vld [vmem:[#allocation8 + $0x2e0] sm:$0xff]
    %v471 = vld [vmem:[#allocation8 + $0x2e8] sm:$0xff]
    %v472 = vld [vmem:[#allocation8 + $0x2f0] sm:$0xff]
    %v473 = vld [vmem:[#allocation8 + $0x2f8] sm:$0xff]
    %v474 = vld [vmem:[#allocation8 + $0x300] sm:$0xff]
    %v475 = vld [vmem:[#allocation8 + $0x308] sm:$0xff]
    %v476 = vld [vmem:[#allocation8 + $0x310] sm:$0xff]
    %v477 = vld [vmem:[#allocation8 + $0x318] sm:$0xff]
    %v478 = vld [vmem:[#allocation8 + $0x320] sm:$0xff]
    %v479 = vld [vmem:[#allocation8 + $0x328] sm:$0xff]
    %v480 = vld [vmem:[#allocation8 + $0x330] sm:$0xff]
    %v481 = vld [vmem:[#allocation8 + $0x338] sm:$0xff]
    %v482 = vld [vmem:[#allocation8 + $0x340] sm:$0xff]
    %v483 = vld [vmem:[#allocation8 + $0x348] sm:$0xff]
    %v484 = vld [vmem:[#allocation8 + $0x350] sm:$0xff]
    %v485 = vld [vmem:[#allocation8 + $0x358] sm:$0xff]
    %v486 = vld [vmem:[#allocation8 + $0x360] sm:$0xff]
    %v487 = vld [vmem:[#allocation8 + $0x368] sm:$0xff]
    %v488 = vld [vmem:[#allocation8 + $0x370] sm:$0xff]
    %v489 = vld [vmem:[#allocation8 + $0x378] sm:$0xff]
    %v490 = vld [vmem:[#allocation8 + $0x380] sm:$0xff]
    %v491 = vld [vmem:[#allocation8 + $0x388] sm:$0xff]
    %v492 = vld [vmem:[#allocation8 + $0x390] sm:$0xff]
    %v493 = vld [vmem:[#allocation8 + $0x398] sm:$0xff]
    %v494 = vld [vmem:[#allocation8 + $0x3a0] sm:$0xff]
    %v495 = vld [vmem:[#allocation8 + $0x3a8] sm:$0xff]
    %v496 = vld [vmem:[#allocation8 + $0x3b0] sm:$0xff]
    %v497 = vld [vmem:[#allocation8 + $0x3b8] sm:$0xff]
    %v498 = vld [vmem:[#allocation8 + $0x3c0] sm:$0xff]
    %v499 = vld [vmem:[#allocation8 + $0x3c8] sm:$0xff]
    %v500 = vld [vmem:[#allocation8 + $0x3d0] sm:$0xff]
    %v501 = vld [vmem:[#allocation8 + $0x3d8] sm:$0xff]
    %v502 = vld [vmem:[#allocation8 + $0x3e0] sm:$0xff]
    %v503 = vld [vmem:[#allocation8 + $0x3e8] sm:$0xff]
    %v504 = vld [vmem:[#allocation8 + $0x3f0] sm:$0xff]
    %v505 = vld [vmem:[#allocation8 + $0x3f8] sm:$0xff]
    %v506 = vld [vmem:[#allocation8 + $0x400] sm:$0xff]
    %v507 = vld [vmem:[#allocation8 + $0x408] sm:$0xff]
    %v508 = vld [vmem:[#allocation8 + $0x410] sm:$0xff]
    %v509 = vld [vmem:[#allocation8 + $0x418] sm:$0xff]
    %v510 = vld [vmem:[#allocation8 + $0x420] sm:$0xff]
    %v511 = vld [vmem:[#allocation8 + $0x428] sm:$0xff]
    %v512 = vld [vmem:[#allocation8 + $0x430] sm:$0xff]
    %v513 = vld [vmem:[#allocation8 + $0x438] sm:$0xff]
    %v514 = vld [vmem:[#allocation8 + $0x440] sm:$0xff]
    %v515 = vld [vmem:[#allocation8 + $0x448] sm:$0xff]
    %v516 = vld [vmem:[#allocation8 + $0x450] sm:$0xff]
    %v517 = vld [vmem:[#allocation8 + $0x458] sm:$0xff]
    %v518 = vld [vmem:[#allocation8 + $0x460] sm:$0xff]
    %v519 = vld [vmem:[#allocation8 + $0x468] sm:$0xff]
    %v520 = vld [vmem:[#allocation8 + $0x470] sm:$0xff]
    %v521 = vld [vmem:[#allocation8 + $0x478] sm:$0xff]
    %v522 = vld [vmem:[#allocation8 + $0x480] sm:$0xff]
    %v523 = vld [vmem:[#allocation8 + $0x488] sm:$0xff]
    %v524 = vld [vmem:[#allocation8 + $0x490] sm:$0xff]
    %v525 = vld [vmem:[#allocation8 + $0x498] sm:$0xff]
    %v526 = vld [vmem:[#allocation8 + $0x4a0] sm:$0xff]
    %v527 = vld [vmem:[#allocation8 + $0x4a8] sm:$0xff]
    %v528 = vld [vmem:[#allocation8 + $0x4b0] sm:$0xff]
    %v529 = vld [vmem:[#allocation8 + $0x4b8] sm:$0xff]
    %v530 = vld [vmem:[#allocation8 + $0x4c0] sm:$0xff]
    %v531 = vld [vmem:[#allocation8 + $0x4c8] sm:$0xff]
    %v532 = vld [vmem:[#allocation8 + $0x4d0] sm:$0xff]
    %v533 = vld [vmem:[#allocation8 + $0x4d8] sm:$0xff]
    %v534 = vld [vmem:[#allocation8 + $0x4e0] sm:$0xff]
    %v535 = vld [vmem:[#allocation8 + $0x4e8] sm:$0xff]
    %v536 = vld [vmem:[#allocation8 + $0x4f0] sm:$0xff]
    %v537 = vld [vmem:[#allocation8 + $0x4f8] sm:$0xff]
    %v538 = vld [vmem:[#allocation8 + $0x500] sm:$0xff]
    %v539 = vld [vmem:[#allocation8 + $0x508] sm:$0xff]
    %v540 = vld [vmem:[#allocation8 + $0x510] sm:$0xff]
    %v541 = vld [vmem:[#allocation8 + $0x518] sm:$0xff]
    %v542 = vld [vmem:[#allocation8 + $0x520] sm:$0xff]
    %v543 = vld [vmem:[#allocation8 + $0x528] sm:$0xff]
    %v544 = vld [vmem:[#allocation8 + $0x530] sm:$0xff]
    %v545 = vld [vmem:[#allocation8 + $0x538] sm:$0xff]
    %v546 = vld [vmem:[#allocation8 + $0x540] sm:$0xff]
    %v547 = vld [vmem:[#allocation8 + $0x548] sm:$0xff]
    %v548 = vld [vmem:[#allocation8 + $0x550] sm:$0xff]
    %v549 = vld [vmem:[#allocation8 + $0x558] sm:$0xff]
    %v550 = vld [vmem:[#allocation8 + $0x560] sm:$0xff]
    %v551 = vld [vmem:[#allocation8 + $0x568] sm:$0xff]
    %v552 = vld [vmem:[#allocation8 + $0x570] sm:$0xff]
    %v553 = vld [vmem:[#allocation8 + $0x578] sm:$0xff]
    %v554 = vld [vmem:[#allocation8 + $0x580] sm:$0xff]
    %v555 = vld [vmem:[#allocation8 + $0x588] sm:$0xff]
    %v556 = vld [vmem:[#allocation8 + $0x590] sm:$0xff]
    %v557 = vld [vmem:[#allocation8 + $0x598] sm:$0xff]
    %v558 = vld [vmem:[#allocation8 + $0x5a0] sm:$0xff]
    %v559 = vld [vmem:[#allocation8 + $0x5a8] sm:$0xff]
    %v560 = vld [vmem:[#allocation8 + $0x5b0] sm:$0xff]
    %v561 = vld [vmem:[#allocation8 + $0x5b8] sm:$0xff]
    %v562 = vld [vmem:[#allocation8 + $0x5c0] sm:$0xff]
    %v563 = vld [vmem:[#allocation8 + $0x5c8] sm:$0xff]
    %v564 = vld [vmem:[#allocation8 + $0x5d0] sm:$0xff]
    %v565 = vld [vmem:[#allocation8 + $0x5d8] sm:$0xff]
    %v566 = vld [vmem:[#allocation8 + $0x5e0] sm:$0xff]
    %v567 = vld [vmem:[#allocation8 + $0x5e8] sm:$0xff]
    %v568 = vld [vmem:[#allocation8 + $0x5f0] sm:$0xff]
    %v569 = vld [vmem:[#allocation8 + $0x5f8] sm:$0xff]
    %v570 = vld [vmem:[#allocation8 + $0x600] sm:$0xff]
    %v571 = vld [vmem:[#allocation8 + $0x608] sm:$0xff]
    %v572 = vld [vmem:[#allocation8 + $0x610] sm:$0xff]
    %v573 = vld [vmem:[#allocation8 + $0x618] sm:$0xff]
    %v574 = vld [vmem:[#allocation8 + $0x620] sm:$0xff]
    %v575 = vld [vmem:[#allocation8 + $0x628] sm:$0xff]
    %v576 = vld [vmem:[#allocation8 + $0x630] sm:$0xff]
    %v577 = vld [vmem:[#allocation8 + $0x638] sm:$0xff]
    %v578 = vld [vmem:[#allocation8 + $0x640] sm:$0xff]
    %v579 = vld [vmem:[#allocation8 + $0x648] sm:$0xff]
    %v580 = vld [vmem:[#allocation8 + $0x650] sm:$0xff]
    %v581 = vld [vmem:[#allocation8 + $0x658] sm:$0xff]
    %v582 = vld [vmem:[#allocation8 + $0x660] sm:$0xff]
    %v583 = vld [vmem:[#allocation8 + $0x668] sm:$0xff]
    %v584 = vld [vmem:[#allocation8 + $0x670] sm:$0xff]
    %v585 = vld [vmem:[#allocation8 + $0x678] sm:$0xff]
    %v586 = vld [vmem:[#allocation8 + $0x680] sm:$0xff]
    %v587 = vld [vmem:[#allocation8 + $0x688] sm:$0xff]
    %v588 = vld [vmem:[#allocation8 + $0x690] sm:$0xff]
    %v589 = vld [vmem:[#allocation8 + $0x698] sm:$0xff]
    %v590 = vld [vmem:[#allocation8 + $0x6a0] sm:$0xff]
    %v591 = vld [vmem:[#allocation8 + $0x6a8] sm:$0xff]
    %v592 = vld [vmem:[#allocation8 + $0x6b0] sm:$0xff]
    %v593 = vld [vmem:[#allocation8 + $0x6b8] sm:$0xff]
    %v594 = vld [vmem:[#allocation8 + $0x6c0] sm:$0xff]
    %v595 = vld [vmem:[#allocation8 + $0x6c8] sm:$0xff]
    %v596 = vld [vmem:[#allocation8 + $0x6d0] sm:$0xff]
    %v597 = vld [vmem:[#allocation8 + $0x6d8] sm:$0xff]
    %v598 = vld [vmem:[#allocation8 + $0x6e0] sm:$0xff]
    %v599 = vld [vmem:[#allocation8 + $0x6e8] sm:$0xff]
    %v600 = vld [vmem:[#allocation8 + $0x6f0] sm:$0xff]
    %v601 = vld [vmem:[#allocation8 + $0x6f8] sm:$0xff]
    %v602 = vld [vmem:[#allocation8 + $0x700] sm:$0xff]
    %v603 = vld [vmem:[#allocation8 + $0x708] sm:$0xff]
    %v604 = vld [vmem:[#allocation8 + $0x710] sm:$0xff]
    %v605 = vld [vmem:[#allocation8 + $0x718] sm:$0xff]
    %v606 = vld [vmem:[#allocation8 + $0x720] sm:$0xff]
    %v607 = vld [vmem:[#allocation8 + $0x728] sm:$0xff]
    %v608 = vld [vmem:[#allocation8 + $0x730] sm:$0xff]
    %v609 = vld [vmem:[#allocation8 + $0x738] sm:$0xff]
    %v610 = vld [vmem:[#allocation8 + $0x740] sm:$0xff]
    %v611 = vld [vmem:[#allocation8 + $0x748] sm:$0xff]
    %v612 = vld [vmem:[#allocation8 + $0x750] sm:$0xff]
    %v613 = vld [vmem:[#allocation8 + $0x758] sm:$0xff]
    %v614 = vld [vmem:[#allocation8 + $0x760] sm:$0xff]
    %v615 = vld [vmem:[#allocation8 + $0x768] sm:$0xff]
    %v616 = vld [vmem:[#allocation8 + $0x770] sm:$0xff]
    %v617 = vld [vmem:[#allocation8 + $0x778] sm:$0xff]
    %v618 = vld [vmem:[#allocation8 + $0x780] sm:$0xff]
    %v619 = vld [vmem:[#allocation8 + $0x788] sm:$0xff]
    %v620 = vld [vmem:[#allocation8 + $0x790] sm:$0xff]
    %v621 = vld [vmem:[#allocation8 + $0x798] sm:$0xff]
    %v622 = vld [vmem:[#allocation8 + $0x7a0] sm:$0xff]
    %v623 = vld [vmem:[#allocation8 + $0x7a8] sm:$0xff]
    %v624 = vld [vmem:[#allocation8 + $0x7b0] sm:$0xff]
    %v625 = vld [vmem:[#allocation8 + $0x7b8] sm:$0xff]
    %v626 = vld [vmem:[#allocation8 + $0x7c0] sm:$0xff]
    %v627 = vld [vmem:[#allocation8 + $0x7c8] sm:$0xff]
    %v628 = vld [vmem:[#allocation8 + $0x7d0] sm:$0xff]
    %v629 = vld [vmem:[#allocation8 + $0x7d8] sm:$0xff]
    %v630 = vld [vmem:[#allocation8 + $0x7e0] sm:$0xff]
    %v631 = vld [vmem:[#allocation8 + $0x7e8] sm:$0xff]
    %v632 = vld [vmem:[#allocation8 + $0x7f0] sm:$0xff]
    %v633 = vld [vmem:[#allocation8 + $0x7f8] sm:$0xff]
    %v634 = vld [vmem:[%s5] sm:$0xff]
    %v636 = vlaneseq
    %v637 = vshrl.u32 %v636, 7
    %v638 = vsub.s32 0, %v637
    %v639 = vrot.slane %v634, %v638
    %v640 = vlaneseq
    %v641 = vshrl.u32 %v640, 7
    %v642 = vsub.s32 1, %v641
    %v643 = vrot.slane %v634, %v642
    %v644 = vlaneseq
    %v645 = vshrl.u32 %v644, 7
    %v646 = vsub.s32 2, %v645
    %v647 = vrot.slane %v634, %v646
    %v648 = vlaneseq
    %v649 = vshrl.u32 %v648, 7
    %v650 = vsub.s32 3, %v649
    %v651 = vrot.slane %v634, %v650
    %v652 = vlaneseq
    %v653 = vshrl.u32 %v652, 7
    %v654 = vsub.s32 4, %v653
    %v655 = vrot.slane %v634, %v654
    %v656 = vlaneseq
    %v657 = vshrl.u32 %v656, 7
    %v658 = vsub.s32 5, %v657
    %v659 = vrot.slane %v634, %v658
    %v660 = vlaneseq
    %v661 = vshrl.u32 %v660, 7
    %v662 = vsub.s32 6, %v661
    %v663 = vrot.slane %v634, %v662
    %v664 = vlaneseq
    %v665 = vshrl.u32 %v664, 7
    %v666 = vsub.s32 7, %v665
    %v667 = vrot.slane %v634, %v666
    %v932 = vunpack.c.l.b16 %v378
    %v933 = vunpack.c.h.b16 %v378
    %v934 = vunpack.c.l.b16 %v379
    %v935 = vunpack.c.h.b16 %v379
    %v936 = vunpack.c.l.b16 %v380
    %v937 = vunpack.c.h.b16 %v380
    %v938 = vunpack.c.l.b16 %v381
    %v939 = vunpack.c.h.b16 %v381
    %v940 = vunpack.c.l.b16 %v382
    %v941 = vunpack.c.h.b16 %v382
    %v942 = vunpack.c.l.b16 %v383
    %v943 = vunpack.c.h.b16 %v383
    %v944 = vunpack.c.l.b16 %v384
    %v945 = vunpack.c.h.b16 %v384
    %v946 = vunpack.c.l.b16 %v385
    %v947 = vunpack.c.h.b16 %v385
    %v948 = vunpack.c.l.b16 %v386
    %v949 = vunpack.c.h.b16 %v386
    %v950 = vunpack.c.l.b16 %v387
    %v951 = vunpack.c.h.b16 %v387
    %v952 = vunpack.c.l.b16 %v388
    %v953 = vunpack.c.h.b16 %v388
    %v954 = vunpack.c.l.b16 %v389
    %v955 = vunpack.c.h.b16 %v389
    %v956 = vunpack.c.l.b16 %v390
    %v957 = vunpack.c.h.b16 %v390
    %v958 = vunpack.c.l.b16 %v391
    %v959 = vunpack.c.h.b16 %v391
    %v960 = vunpack.c.l.b16 %v392
    %v961 = vunpack.c.h.b16 %v392
    %v962 = vunpack.c.l.b16 %v393
    %v963 = vunpack.c.h.b16 %v393
    %v964 = vunpack.c.l.b16 %v394
    %v965 = vunpack.c.h.b16 %v394
    %v966 = vunpack.c.l.b16 %v395
    %v967 = vunpack.c.h.b16 %v395
    %v968 = vunpack.c.l.b16 %v396
    %v969 = vunpack.c.h.b16 %v396
    %v970 = vunpack.c.l.b16 %v397
    %v971 = vunpack.c.h.b16 %v397
    %v972 = vunpack.c.l.b16 %v398
    %v973 = vunpack.c.h.b16 %v398
    %v974 = vunpack.c.l.b16 %v399
    %v975 = vunpack.c.h.b16 %v399
    %v976 = vunpack.c.l.b16 %v400
    %v977 = vunpack.c.h.b16 %v400
    %v978 = vunpack.c.l.b16 %v401
    %v979 = vunpack.c.h.b16 %v401
    %v980 = vunpack.c.l.b16 %v402
    %v981 = vunpack.c.h.b16 %v402
    %v982 = vunpack.c.l.b16 %v403
    %v983 = vunpack.c.h.b16 %v403
    %v984 = vunpack.c.l.b16 %v404
    %v985 = vunpack.c.h.b16 %v404
    %v986 = vunpack.c.l.b16 %v405
    %v987 = vunpack.c.h.b16 %v405
    %v988 = vunpack.c.l.b16 %v406
    %v989 = vunpack.c.h.b16 %v406
    %v990 = vunpack.c.l.b16 %v407
    %v991 = vunpack.c.h.b16 %v407
    %v992 = vunpack.c.l.b16 %v408
    %v993 = vunpack.c.h.b16 %v408
    %v994 = vunpack.c.l.b16 %v409
    %v995 = vunpack.c.h.b16 %v409
    %v996 = vunpack.c.l.b16 %v410
    %v997 = vunpack.c.h.b16 %v410
    %v998 = vunpack.c.l.b16 %v411
    %v999 = vunpack.c.h.b16 %v411
    %v1000 = vunpack.c.l.b16 %v412
    %v1001 = vunpack.c.h.b16 %v412
    %v1002 = vunpack.c.l.b16 %v413
    %v1003 = vunpack.c.h.b16 %v413
    %v1004 = vunpack.c.l.b16 %v414
    %v1005 = vunpack.c.h.b16 %v414
    %v1006 = vunpack.c.l.b16 %v415
    %v1007 = vunpack.c.h.b16 %v415
    %v1008 = vunpack.c.l.b16 %v416
    %v1009 = vunpack.c.h.b16 %v416
    %v1010 = vunpack.c.l.b16 %v417
    %v1011 = vunpack.c.h.b16 %v417
    %v1012 = vunpack.c.l.b16 %v418
    %v1013 = vunpack.c.h.b16 %v418
    %v1014 = vunpack.c.l.b16 %v419
    %v1015 = vunpack.c.h.b16 %v419
    %v1016 = vunpack.c.l.b16 %v420
    %v1017 = vunpack.c.h.b16 %v420
    %v1018 = vunpack.c.l.b16 %v421
    %v1019 = vunpack.c.h.b16 %v421
    %v1020 = vunpack.c.l.b16 %v422
    %v1021 = vunpack.c.h.b16 %v422
    %v1022 = vunpack.c.l.b16 %v423
    %v1023 = vunpack.c.h.b16 %v423
    %v1024 = vunpack.c.l.b16 %v424
    %v1025 = vunpack.c.h.b16 %v424
    %v1026 = vunpack.c.l.b16 %v425
    %v1027 = vunpack.c.h.b16 %v425
    %v1028 = vunpack.c.l.b16 %v426
    %v1029 = vunpack.c.h.b16 %v426
    %v1030 = vunpack.c.l.b16 %v427
    %v1031 = vunpack.c.h.b16 %v427
    %v1032 = vunpack.c.l.b16 %v428
    %v1033 = vunpack.c.h.b16 %v428
    %v1034 = vunpack.c.l.b16 %v429
    %v1035 = vunpack.c.h.b16 %v429
    %v1036 = vunpack.c.l.b16 %v430
    %v1037 = vunpack.c.h.b16 %v430
    %v1038 = vunpack.c.l.b16 %v431
    %v1039 = vunpack.c.h.b16 %v431
    %v1040 = vunpack.c.l.b16 %v432
    %v1041 = vunpack.c.h.b16 %v432
    %v1042 = vunpack.c.l.b16 %v433
    %v1043 = vunpack.c.h.b16 %v433
    %v1044 = vunpack.c.l.b16 %v434
    %v1045 = vunpack.c.h.b16 %v434
    %v1046 = vunpack.c.l.b16 %v435
    %v1047 = vunpack.c.h.b16 %v435
    %v1048 = vunpack.c.l.b16 %v436
    %v1049 = vunpack.c.h.b16 %v436
    %v1050 = vunpack.c.l.b16 %v437
    %v1051 = vunpack.c.h.b16 %v437
    %v1052 = vunpack.c.l.b16 %v438
    %v1053 = vunpack.c.h.b16 %v438
    %v1054 = vunpack.c.l.b16 %v439
    %v1055 = vunpack.c.h.b16 %v439
    %v1056 = vunpack.c.l.b16 %v440
    %v1057 = vunpack.c.h.b16 %v440
    %v1058 = vunpack.c.l.b16 %v441
    %v1059 = vunpack.c.h.b16 %v441
    %v1060 = vunpack.c.l.b16 %v442
    %v1061 = vunpack.c.h.b16 %v442
    %v1062 = vunpack.c.l.b16 %v443
    %v1063 = vunpack.c.h.b16 %v443
    %v1064 = vunpack.c.l.b16 %v444
    %v1065 = vunpack.c.h.b16 %v444
    %v1066 = vunpack.c.l.b16 %v445
    %v1067 = vunpack.c.h.b16 %v445
    %v1068 = vunpack.c.l.b16 %v446
    %v1069 = vunpack.c.h.b16 %v446
    %v1070 = vunpack.c.l.b16 %v447
    %v1071 = vunpack.c.h.b16 %v447
    %v1072 = vunpack.c.l.b16 %v448
    %v1073 = vunpack.c.h.b16 %v448
    %v1074 = vunpack.c.l.b16 %v449
    %v1075 = vunpack.c.h.b16 %v449
    %v1076 = vunpack.c.l.b16 %v450
    %v1077 = vunpack.c.h.b16 %v450
    %v1078 = vunpack.c.l.b16 %v451
    %v1079 = vunpack.c.h.b16 %v451
    %v1080 = vunpack.c.l.b16 %v452
    %v1081 = vunpack.c.h.b16 %v452
    %v1082 = vunpack.c.l.b16 %v453
    %v1083 = vunpack.c.h.b16 %v453
    %v1084 = vunpack.c.l.b16 %v454
    %v1085 = vunpack.c.h.b16 %v454
    %v1086 = vunpack.c.l.b16 %v455
    %v1087 = vunpack.c.h.b16 %v455
    %v1088 = vunpack.c.l.b16 %v456
    %v1089 = vunpack.c.h.b16 %v456
    %v1090 = vunpack.c.l.b16 %v457
    %v1091 = vunpack.c.h.b16 %v457
    %v1092 = vunpack.c.l.b16 %v458
    %v1093 = vunpack.c.h.b16 %v458
    %v1094 = vunpack.c.l.b16 %v459
    %v1095 = vunpack.c.h.b16 %v459
    %v1096 = vunpack.c.l.b16 %v460
    %v1097 = vunpack.c.h.b16 %v460
    %v1098 = vunpack.c.l.b16 %v461
    %v1099 = vunpack.c.h.b16 %v461
    %v1100 = vunpack.c.l.b16 %v462
    %v1101 = vunpack.c.h.b16 %v462
    %v1102 = vunpack.c.l.b16 %v463
    %v1103 = vunpack.c.h.b16 %v463
    %v1104 = vunpack.c.l.b16 %v464
    %v1105 = vunpack.c.h.b16 %v464
    %v1106 = vunpack.c.l.b16 %v465
    %v1107 = vunpack.c.h.b16 %v465
    %v1108 = vunpack.c.l.b16 %v466
    %v1109 = vunpack.c.h.b16 %v466
    %v1110 = vunpack.c.l.b16 %v467
    %v1111 = vunpack.c.h.b16 %v467
    %v1112 = vunpack.c.l.b16 %v468
    %v1113 = vunpack.c.h.b16 %v468
    %v1114 = vunpack.c.l.b16 %v469
    %v1115 = vunpack.c.h.b16 %v469
    %v1116 = vunpack.c.l.b16 %v470
    %v1117 = vunpack.c.h.b16 %v470
    %v1118 = vunpack.c.l.b16 %v471
    %v1119 = vunpack.c.h.b16 %v471
    %v1120 = vunpack.c.l.b16 %v472
    %v1121 = vunpack.c.h.b16 %v472
    %v1122 = vunpack.c.l.b16 %v473
    %v1123 = vunpack.c.h.b16 %v473
    %v1124 = vunpack.c.l.b16 %v474
    %v1125 = vunpack.c.h.b16 %v474
    %v1126 = vunpack.c.l.b16 %v475
    %v1127 = vunpack.c.h.b16 %v475
    %v1128 = vunpack.c.l.b16 %v476
    %v1129 = vunpack.c.h.b16 %v476
    %v1130 = vunpack.c.l.b16 %v477
    %v1131 = vunpack.c.h.b16 %v477
    %v1132 = vunpack.c.l.b16 %v478
    %v1133 = vunpack.c.h.b16 %v478
    %v1134 = vunpack.c.l.b16 %v479
    %v1135 = vunpack.c.h.b16 %v479
    %v1136 = vunpack.c.l.b16 %v480
    %v1137 = vunpack.c.h.b16 %v480
    %v1138 = vunpack.c.l.b16 %v481
    %v1139 = vunpack.c.h.b16 %v481
    %v1140 = vunpack.c.l.b16 %v482
    %v1141 = vunpack.c.h.b16 %v482
    %v1142 = vunpack.c.l.b16 %v483
    %v1143 = vunpack.c.h.b16 %v483
    %v1144 = vunpack.c.l.b16 %v484
    %v1145 = vunpack.c.h.b16 %v484
    %v1146 = vunpack.c.l.b16 %v485
    %v1147 = vunpack.c.h.b16 %v485
    %v1148 = vunpack.c.l.b16 %v486
    %v1149 = vunpack.c.h.b16 %v486
    %v1150 = vunpack.c.l.b16 %v487
    %v1151 = vunpack.c.h.b16 %v487
    %v1152 = vunpack.c.l.b16 %v488
    %v1153 = vunpack.c.h.b16 %v488
    %v1154 = vunpack.c.l.b16 %v489
    %v1155 = vunpack.c.h.b16 %v489
    %v1156 = vunpack.c.l.b16 %v490
    %v1157 = vunpack.c.h.b16 %v490
    %v1158 = vunpack.c.l.b16 %v491
    %v1159 = vunpack.c.h.b16 %v491
    %v1160 = vunpack.c.l.b16 %v492
    %v1161 = vunpack.c.h.b16 %v492
    %v1162 = vunpack.c.l.b16 %v493
    %v1163 = vunpack.c.h.b16 %v493
    %v1164 = vunpack.c.l.b16 %v494
    %v1165 = vunpack.c.h.b16 %v494
    %v1166 = vunpack.c.l.b16 %v495
    %v1167 = vunpack.c.h.b16 %v495
    %v1168 = vunpack.c.l.b16 %v496
    %v1169 = vunpack.c.h.b16 %v496
    %v1170 = vunpack.c.l.b16 %v497
    %v1171 = vunpack.c.h.b16 %v497
    %v1172 = vunpack.c.l.b16 %v498
    %v1173 = vunpack.c.h.b16 %v498
    %v1174 = vunpack.c.l.b16 %v499
    %v1175 = vunpack.c.h.b16 %v499
    %v1176 = vunpack.c.l.b16 %v500
    %v1177 = vunpack.c.h.b16 %v500
    %v1178 = vunpack.c.l.b16 %v501
    %v1179 = vunpack.c.h.b16 %v501
    %v1180 = vunpack.c.l.b16 %v502
    %v1181 = vunpack.c.h.b16 %v502
    %v1182 = vunpack.c.l.b16 %v503
    %v1183 = vunpack.c.h.b16 %v503
    %v1184 = vunpack.c.l.b16 %v504
    %v1185 = vunpack.c.h.b16 %v504
    %v1186 = vunpack.c.l.b16 %v505
    %v1187 = vunpack.c.h.b16 %v505
    %v1188 = vunpack.c.l.b16 %v506
    %v1189 = vunpack.c.h.b16 %v506
    %v1190 = vunpack.c.l.b16 %v507
    %v1191 = vunpack.c.h.b16 %v507
    %v1192 = vunpack.c.l.b16 %v508
    %v1193 = vunpack.c.h.b16 %v508
    %v1194 = vunpack.c.l.b16 %v509
    %v1195 = vunpack.c.h.b16 %v509
    %v1196 = vunpack.c.l.b16 %v510
    %v1197 = vunpack.c.h.b16 %v510
    %v1198 = vunpack.c.l.b16 %v511
    %v1199 = vunpack.c.h.b16 %v511
    %v1200 = vunpack.c.l.b16 %v512
    %v1201 = vunpack.c.h.b16 %v512
    %v1202 = vunpack.c.l.b16 %v513
    %v1203 = vunpack.c.h.b16 %v513
    %v1204 = vunpack.c.l.b16 %v514
    %v1205 = vunpack.c.h.b16 %v514
    %v1206 = vunpack.c.l.b16 %v515
    %v1207 = vunpack.c.h.b16 %v515
    %v1208 = vunpack.c.l.b16 %v516
    %v1209 = vunpack.c.h.b16 %v516
    %v1210 = vunpack.c.l.b16 %v517
    %v1211 = vunpack.c.h.b16 %v517
    %v1212 = vunpack.c.l.b16 %v518
    %v1213 = vunpack.c.h.b16 %v518
    %v1214 = vunpack.c.l.b16 %v519
    %v1215 = vunpack.c.h.b16 %v519
    %v1216 = vunpack.c.l.b16 %v520
    %v1217 = vunpack.c.h.b16 %v520
    %v1218 = vunpack.c.l.b16 %v521
    %v1219 = vunpack.c.h.b16 %v521
    %v1220 = vunpack.c.l.b16 %v522
    %v1221 = vunpack.c.h.b16 %v522
    %v1222 = vunpack.c.l.b16 %v523
    %v1223 = vunpack.c.h.b16 %v523
    %v1224 = vunpack.c.l.b16 %v524
    %v1225 = vunpack.c.h.b16 %v524
    %v1226 = vunpack.c.l.b16 %v525
    %v1227 = vunpack.c.h.b16 %v525
    %v1228 = vunpack.c.l.b16 %v526
    %v1229 = vunpack.c.h.b16 %v526
    %v1230 = vunpack.c.l.b16 %v527
    %v1231 = vunpack.c.h.b16 %v527
    %v1232 = vunpack.c.l.b16 %v528
    %v1233 = vunpack.c.h.b16 %v528
    %v1234 = vunpack.c.l.b16 %v529
    %v1235 = vunpack.c.h.b16 %v529
    %v1236 = vunpack.c.l.b16 %v530
    %v1237 = vunpack.c.h.b16 %v530
    %v1238 = vunpack.c.l.b16 %v531
    %v1239 = vunpack.c.h.b16 %v531
    %v1240 = vunpack.c.l.b16 %v532
    %v1241 = vunpack.c.h.b16 %v532
    %v1242 = vunpack.c.l.b16 %v533
    %v1243 = vunpack.c.h.b16 %v533
    %v1244 = vunpack.c.l.b16 %v534
    %v1245 = vunpack.c.h.b16 %v534
    %v1246 = vunpack.c.l.b16 %v535
    %v1247 = vunpack.c.h.b16 %v535
    %v1248 = vunpack.c.l.b16 %v536
    %v1249 = vunpack.c.h.b16 %v536
    %v1250 = vunpack.c.l.b16 %v537
    %v1251 = vunpack.c.h.b16 %v537
    %v1252 = vunpack.c.l.b16 %v538
    %v1253 = vunpack.c.h.b16 %v538
    %v1254 = vunpack.c.l.b16 %v539
    %v1255 = vunpack.c.h.b16 %v539
    %v1256 = vunpack.c.l.b16 %v540
    %v1257 = vunpack.c.h.b16 %v540
    %v1258 = vunpack.c.l.b16 %v541
    %v1259 = vunpack.c.h.b16 %v541
    %v1260 = vunpack.c.l.b16 %v542
    %v1261 = vunpack.c.h.b16 %v542
    %v1262 = vunpack.c.l.b16 %v543
    %v1263 = vunpack.c.h.b16 %v543
    %v1264 = vunpack.c.l.b16 %v544
    %v1265 = vunpack.c.h.b16 %v544
    %v1266 = vunpack.c.l.b16 %v545
    %v1267 = vunpack.c.h.b16 %v545
    %v1268 = vunpack.c.l.b16 %v546
    %v1269 = vunpack.c.h.b16 %v546
    %v1270 = vunpack.c.l.b16 %v547
    %v1271 = vunpack.c.h.b16 %v547
    %v1272 = vunpack.c.l.b16 %v548
    %v1273 = vunpack.c.h.b16 %v548
    %v1274 = vunpack.c.l.b16 %v549
    %v1275 = vunpack.c.h.b16 %v549
    %v1276 = vunpack.c.l.b16 %v550
    %v1277 = vunpack.c.h.b16 %v550
    %v1278 = vunpack.c.l.b16 %v551
    %v1279 = vunpack.c.h.b16 %v551
    %v1280 = vunpack.c.l.b16 %v552
    %v1281 = vunpack.c.h.b16 %v552
    %v1282 = vunpack.c.l.b16 %v553
    %v1283 = vunpack.c.h.b16 %v553
    %v1284 = vunpack.c.l.b16 %v554
    %v1285 = vunpack.c.h.b16 %v554
    %v1286 = vunpack.c.l.b16 %v555
    %v1287 = vunpack.c.h.b16 %v555
    %v1288 = vunpack.c.l.b16 %v556
    %v1289 = vunpack.c.h.b16 %v556
    %v1290 = vunpack.c.l.b16 %v557
    %v1291 = vunpack.c.h.b16 %v557
    %v1292 = vunpack.c.l.b16 %v558
    %v1293 = vunpack.c.h.b16 %v558
    %v1294 = vunpack.c.l.b16 %v559
    %v1295 = vunpack.c.h.b16 %v559
    %v1296 = vunpack.c.l.b16 %v560
    %v1297 = vunpack.c.h.b16 %v560
    %v1298 = vunpack.c.l.b16 %v561
    %v1299 = vunpack.c.h.b16 %v561
    %v1300 = vunpack.c.l.b16 %v562
    %v1301 = vunpack.c.h.b16 %v562
    %v1302 = vunpack.c.l.b16 %v563
    %v1303 = vunpack.c.h.b16 %v563
    %v1304 = vunpack.c.l.b16 %v564
    %v1305 = vunpack.c.h.b16 %v564
    %v1306 = vunpack.c.l.b16 %v565
    %v1307 = vunpack.c.h.b16 %v565
    %v1308 = vunpack.c.l.b16 %v566
    %v1309 = vunpack.c.h.b16 %v566
    %v1310 = vunpack.c.l.b16 %v567
    %v1311 = vunpack.c.h.b16 %v567
    %v1312 = vunpack.c.l.b16 %v568
    %v1313 = vunpack.c.h.b16 %v568
    %v1314 = vunpack.c.l.b16 %v569
    %v1315 = vunpack.c.h.b16 %v569
    %v1316 = vunpack.c.l.b16 %v570
    %v1317 = vunpack.c.h.b16 %v570
    %v1318 = vunpack.c.l.b16 %v571
    %v1319 = vunpack.c.h.b16 %v571
    %v1320 = vunpack.c.l.b16 %v572
    %v1321 = vunpack.c.h.b16 %v572
    %v1322 = vunpack.c.l.b16 %v573
    %v1323 = vunpack.c.h.b16 %v573
    %v1324 = vunpack.c.l.b16 %v574
    %v1325 = vunpack.c.h.b16 %v574
    %v1326 = vunpack.c.l.b16 %v575
    %v1327 = vunpack.c.h.b16 %v575
    %v1328 = vunpack.c.l.b16 %v576
    %v1329 = vunpack.c.h.b16 %v576
    %v1330 = vunpack.c.l.b16 %v577
    %v1331 = vunpack.c.h.b16 %v577
    %v1332 = vunpack.c.l.b16 %v578
    %v1333 = vunpack.c.h.b16 %v578
    %v1334 = vunpack.c.l.b16 %v579
    %v1335 = vunpack.c.h.b16 %v579
    %v1336 = vunpack.c.l.b16 %v580
    %v1337 = vunpack.c.h.b16 %v580
    %v1338 = vunpack.c.l.b16 %v581
    %v1339 = vunpack.c.h.b16 %v581
    %v1340 = vunpack.c.l.b16 %v582
    %v1341 = vunpack.c.h.b16 %v582
    %v1342 = vunpack.c.l.b16 %v583
    %v1343 = vunpack.c.h.b16 %v583
    %v1344 = vunpack.c.l.b16 %v584
    %v1345 = vunpack.c.h.b16 %v584
    %v1346 = vunpack.c.l.b16 %v585
    %v1347 = vunpack.c.h.b16 %v585
    %v1348 = vunpack.c.l.b16 %v586
    %v1349 = vunpack.c.h.b16 %v586
    %v1350 = vunpack.c.l.b16 %v587
    %v1351 = vunpack.c.h.b16 %v587
    %v1352 = vunpack.c.l.b16 %v588
    %v1353 = vunpack.c.h.b16 %v588
    %v1354 = vunpack.c.l.b16 %v589
    %v1355 = vunpack.c.h.b16 %v589
    %v1356 = vunpack.c.l.b16 %v590
    %v1357 = vunpack.c.h.b16 %v590
    %v1358 = vunpack.c.l.b16 %v591
    %v1359 = vunpack.c.h.b16 %v591
    %v1360 = vunpack.c.l.b16 %v592
    %v1361 = vunpack.c.h.b16 %v592
    %v1362 = vunpack.c.l.b16 %v593
    %v1363 = vunpack.c.h.b16 %v593
    %v1364 = vunpack.c.l.b16 %v594
    %v1365 = vunpack.c.h.b16 %v594
    %v1366 = vunpack.c.l.b16 %v595
    %v1367 = vunpack.c.h.b16 %v595
    %v1368 = vunpack.c.l.b16 %v596
    %v1369 = vunpack.c.h.b16 %v596
    %v1370 = vunpack.c.l.b16 %v597
    %v1371 = vunpack.c.h.b16 %v597
    %v1372 = vunpack.c.l.b16 %v598
    %v1373 = vunpack.c.h.b16 %v598
    %v1374 = vunpack.c.l.b16 %v599
    %v1375 = vunpack.c.h.b16 %v599
    %v1376 = vunpack.c.l.b16 %v600
    %v1377 = vunpack.c.h.b16 %v600
    %v1378 = vunpack.c.l.b16 %v601
    %v1379 = vunpack.c.h.b16 %v601
    %v1380 = vunpack.c.l.b16 %v602
    %v1381 = vunpack.c.h.b16 %v602
    %v1382 = vunpack.c.l.b16 %v603
    %v1383 = vunpack.c.h.b16 %v603
    %v1384 = vunpack.c.l.b16 %v604
    %v1385 = vunpack.c.h.b16 %v604
    %v1386 = vunpack.c.l.b16 %v605
    %v1387 = vunpack.c.h.b16 %v605
    %v1388 = vunpack.c.l.b16 %v606
    %v1389 = vunpack.c.h.b16 %v606
    %v1390 = vunpack.c.l.b16 %v607
    %v1391 = vunpack.c.h.b16 %v607
    %v1392 = vunpack.c.l.b16 %v608
    %v1393 = vunpack.c.h.b16 %v608
    %v1394 = vunpack.c.l.b16 %v609
    %v1395 = vunpack.c.h.b16 %v609
    %v1396 = vunpack.c.l.b16 %v610
    %v1397 = vunpack.c.h.b16 %v610
    %v1398 = vunpack.c.l.b16 %v611
    %v1399 = vunpack.c.h.b16 %v611
    %v1400 = vunpack.c.l.b16 %v612
    %v1401 = vunpack.c.h.b16 %v612
    %v1402 = vunpack.c.l.b16 %v613
    %v1403 = vunpack.c.h.b16 %v613
    %v1404 = vunpack.c.l.b16 %v614
    %v1405 = vunpack.c.h.b16 %v614
    %v1406 = vunpack.c.l.b16 %v615
    %v1407 = vunpack.c.h.b16 %v615
    %v1408 = vunpack.c.l.b16 %v616
    %v1409 = vunpack.c.h.b16 %v616
    %v1410 = vunpack.c.l.b16 %v617
    %v1411 = vunpack.c.h.b16 %v617
    %v1412 = vunpack.c.l.b16 %v618
    %v1413 = vunpack.c.h.b16 %v618
    %v1414 = vunpack.c.l.b16 %v619
    %v1415 = vunpack.c.h.b16 %v619
    %v1416 = vunpack.c.l.b16 %v620
    %v1417 = vunpack.c.h.b16 %v620
    %v1418 = vunpack.c.l.b16 %v621
    %v1419 = vunpack.c.h.b16 %v621
    %v1420 = vunpack.c.l.b16 %v622
    %v1421 = vunpack.c.h.b16 %v622
    %v1422 = vunpack.c.l.b16 %v623
    %v1423 = vunpack.c.h.b16 %v623
    %v1424 = vunpack.c.l.b16 %v624
    %v1425 = vunpack.c.h.b16 %v624
    %v1426 = vunpack.c.l.b16 %v625
    %v1427 = vunpack.c.h.b16 %v625
    %v1428 = vunpack.c.l.b16 %v626
    %v1429 = vunpack.c.h.b16 %v626
    %v1430 = vunpack.c.l.b16 %v627
    %v1431 = vunpack.c.h.b16 %v627
    %v1432 = vunpack.c.l.b16 %v628
    %v1433 = vunpack.c.h.b16 %v628
    %v1434 = vunpack.c.l.b16 %v629
    %v1435 = vunpack.c.h.b16 %v629
    %v1436 = vunpack.c.l.b16 %v630
    %v1437 = vunpack.c.h.b16 %v630
    %v1438 = vunpack.c.l.b16 %v631
    %v1439 = vunpack.c.h.b16 %v631
    %v1440 = vunpack.c.l.b16 %v632
    %v1441 = vunpack.c.h.b16 %v632
    %v1442 = vunpack.c.l.b16 %v633
    %v1443 = vunpack.c.h.b16 %v633
    %v1444 = vpack.c.b16 %v940, %v932
    %v1445 = vpack.c.b16 %v941, %v933
    %v1446 = vpack.c.b16 %v942, %v934
    %v1447 = vpack.c.b16 %v943, %v935
    %v1448 = vpack.c.b16 %v944, %v936
    %v1449 = vpack.c.b16 %v945, %v937
    %v1450 = vpack.c.b16 %v946, %v938
    %v1451 = vpack.c.b16 %v947, %v939
    %v1452 = vpack.c.b16 %v956, %v948
    %v1453 = vpack.c.b16 %v957, %v949
    %v1454 = vpack.c.b16 %v958, %v950
    %v1455 = vpack.c.b16 %v959, %v951
    %v1456 = vpack.c.b16 %v960, %v952
    %v1457 = vpack.c.b16 %v961, %v953
    %v1458 = vpack.c.b16 %v962, %v954
    %v1459 = vpack.c.b16 %v963, %v955
    %v1460 = vpack.c.b16 %v972, %v964
    %v1461 = vpack.c.b16 %v973, %v965
    %v1462 = vpack.c.b16 %v974, %v966
    %v1463 = vpack.c.b16 %v975, %v967
    %v1464 = vpack.c.b16 %v976, %v968
    %v1465 = vpack.c.b16 %v977, %v969
    %v1466 = vpack.c.b16 %v978, %v970
    %v1467 = vpack.c.b16 %v979, %v971
    %v1468 = vpack.c.b16 %v988, %v980
    %v1469 = vpack.c.b16 %v989, %v981
    %v1470 = vpack.c.b16 %v990, %v982
    %v1471 = vpack.c.b16 %v991, %v983
    %v1472 = vpack.c.b16 %v992, %v984
    %v1473 = vpack.c.b16 %v993, %v985
    %v1474 = vpack.c.b16 %v994, %v986
    %v1475 = vpack.c.b16 %v995, %v987
    %v1476 = vpack.c.b16 %v1004, %v996
    %v1477 = vpack.c.b16 %v1005, %v997
    %v1478 = vpack.c.b16 %v1006, %v998
    %v1479 = vpack.c.b16 %v1007, %v999
    %v1480 = vpack.c.b16 %v1008, %v1000
    %v1481 = vpack.c.b16 %v1009, %v1001
    %v1482 = vpack.c.b16 %v1010, %v1002
    %v1483 = vpack.c.b16 %v1011, %v1003
    %v1484 = vpack.c.b16 %v1020, %v1012
    %v1485 = vpack.c.b16 %v1021, %v1013
    %v1486 = vpack.c.b16 %v1022, %v1014
    %v1487 = vpack.c.b16 %v1023, %v1015
    %v1488 = vpack.c.b16 %v1024, %v1016
    %v1489 = vpack.c.b16 %v1025, %v1017
    %v1490 = vpack.c.b16 %v1026, %v1018
    %v1491 = vpack.c.b16 %v1027, %v1019
    %v1492 = vpack.c.b16 %v1036, %v1028
    %v1493 = vpack.c.b16 %v1037, %v1029
    %v1494 = vpack.c.b16 %v1038, %v1030
    %v1495 = vpack.c.b16 %v1039, %v1031
    %v1496 = vpack.c.b16 %v1040, %v1032
    %v1497 = vpack.c.b16 %v1041, %v1033
    %v1498 = vpack.c.b16 %v1042, %v1034
    %v1499 = vpack.c.b16 %v1043, %v1035
    %v1500 = vpack.c.b16 %v1052, %v1044
    %v1501 = vpack.c.b16 %v1053, %v1045
    %v1502 = vpack.c.b16 %v1054, %v1046
    %v1503 = vpack.c.b16 %v1055, %v1047
    %v1504 = vpack.c.b16 %v1056, %v1048
    %v1505 = vpack.c.b16 %v1057, %v1049
    %v1506 = vpack.c.b16 %v1058, %v1050
    %v1507 = vpack.c.b16 %v1059, %v1051
    %v1508 = vpack.c.b16 %v1068, %v1060
    %v1509 = vpack.c.b16 %v1069, %v1061
    %v1510 = vpack.c.b16 %v1070, %v1062
    %v1511 = vpack.c.b16 %v1071, %v1063
    %v1512 = vpack.c.b16 %v1072, %v1064
    %v1513 = vpack.c.b16 %v1073, %v1065
    %v1514 = vpack.c.b16 %v1074, %v1066
    %v1515 = vpack.c.b16 %v1075, %v1067
    %v1516 = vpack.c.b16 %v1084, %v1076
    %v1517 = vpack.c.b16 %v1085, %v1077
    %v1518 = vpack.c.b16 %v1086, %v1078
    %v1519 = vpack.c.b16 %v1087, %v1079
    %v1520 = vpack.c.b16 %v1088, %v1080
    %v1521 = vpack.c.b16 %v1089, %v1081
    %v1522 = vpack.c.b16 %v1090, %v1082
    %v1523 = vpack.c.b16 %v1091, %v1083
    %v1524 = vpack.c.b16 %v1100, %v1092
    %v1525 = vpack.c.b16 %v1101, %v1093
    %v1526 = vpack.c.b16 %v1102, %v1094
    %v1527 = vpack.c.b16 %v1103, %v1095
    %v1528 = vpack.c.b16 %v1104, %v1096
    %v1529 = vpack.c.b16 %v1105, %v1097
    %v1530 = vpack.c.b16 %v1106, %v1098
    %v1531 = vpack.c.b16 %v1107, %v1099
    %v1532 = vpack.c.b16 %v1116, %v1108
    %v1533 = vpack.c.b16 %v1117, %v1109
    %v1534 = vpack.c.b16 %v1118, %v1110
    %v1535 = vpack.c.b16 %v1119, %v1111
    %v1536 = vpack.c.b16 %v1120, %v1112
    %v1537 = vpack.c.b16 %v1121, %v1113
    %v1538 = vpack.c.b16 %v1122, %v1114
    %v1539 = vpack.c.b16 %v1123, %v1115
    %v1540 = vpack.c.b16 %v1132, %v1124
    %v1541 = vpack.c.b16 %v1133, %v1125
    %v1542 = vpack.c.b16 %v1134, %v1126
    %v1543 = vpack.c.b16 %v1135, %v1127
    %v1544 = vpack.c.b16 %v1136, %v1128
    %v1545 = vpack.c.b16 %v1137, %v1129
    %v1546 = vpack.c.b16 %v1138, %v1130
    %v1547 = vpack.c.b16 %v1139, %v1131
    %v1548 = vpack.c.b16 %v1148, %v1140
    %v1549 = vpack.c.b16 %v1149, %v1141
    %v1550 = vpack.c.b16 %v1150, %v1142
    %v1551 = vpack.c.b16 %v1151, %v1143
    %v1552 = vpack.c.b16 %v1152, %v1144
    %v1553 = vpack.c.b16 %v1153, %v1145
    %v1554 = vpack.c.b16 %v1154, %v1146
    %v1555 = vpack.c.b16 %v1155, %v1147
    %v1556 = vpack.c.b16 %v1164, %v1156
    %v1557 = vpack.c.b16 %v1165, %v1157
    %v1558 = vpack.c.b16 %v1166, %v1158
    %v1559 = vpack.c.b16 %v1167, %v1159
    %v1560 = vpack.c.b16 %v1168, %v1160
    %v1561 = vpack.c.b16 %v1169, %v1161
    %v1562 = vpack.c.b16 %v1170, %v1162
    %v1563 = vpack.c.b16 %v1171, %v1163
    %v1564 = vpack.c.b16 %v1180, %v1172
    %v1565 = vpack.c.b16 %v1181, %v1173
    %v1566 = vpack.c.b16 %v1182, %v1174
    %v1567 = vpack.c.b16 %v1183, %v1175
    %v1568 = vpack.c.b16 %v1184, %v1176
    %v1569 = vpack.c.b16 %v1185, %v1177
    %v1570 = vpack.c.b16 %v1186, %v1178
    %v1571 = vpack.c.b16 %v1187, %v1179
    %v1572 = vpack.c.b16 %v1196, %v1188
    %v1573 = vpack.c.b16 %v1197, %v1189
    %v1574 = vpack.c.b16 %v1198, %v1190
    %v1575 = vpack.c.b16 %v1199, %v1191
    %v1576 = vpack.c.b16 %v1200, %v1192
    %v1577 = vpack.c.b16 %v1201, %v1193
    %v1578 = vpack.c.b16 %v1202, %v1194
    %v1579 = vpack.c.b16 %v1203, %v1195
    %v1580 = vpack.c.b16 %v1212, %v1204
    %v1581 = vpack.c.b16 %v1213, %v1205
    %v1582 = vpack.c.b16 %v1214, %v1206
    %v1583 = vpack.c.b16 %v1215, %v1207
    %v1584 = vpack.c.b16 %v1216, %v1208
    %v1585 = vpack.c.b16 %v1217, %v1209
    %v1586 = vpack.c.b16 %v1218, %v1210
    %v1587 = vpack.c.b16 %v1219, %v1211
    %v1588 = vpack.c.b16 %v1228, %v1220
    %v1589 = vpack.c.b16 %v1229, %v1221
    %v1590 = vpack.c.b16 %v1230, %v1222
    %v1591 = vpack.c.b16 %v1231, %v1223
    %v1592 = vpack.c.b16 %v1232, %v1224
    %v1593 = vpack.c.b16 %v1233, %v1225
    %v1594 = vpack.c.b16 %v1234, %v1226
    %v1595 = vpack.c.b16 %v1235, %v1227
    %v1596 = vpack.c.b16 %v1244, %v1236
    %v1597 = vpack.c.b16 %v1245, %v1237
    %v1598 = vpack.c.b16 %v1246, %v1238
    %v1599 = vpack.c.b16 %v1247, %v1239
    %v1600 = vpack.c.b16 %v1248, %v1240
    %v1601 = vpack.c.b16 %v1249, %v1241
    %v1602 = vpack.c.b16 %v1250, %v1242
    %v1603 = vpack.c.b16 %v1251, %v1243
    %v1604 = vpack.c.b16 %v1260, %v1252
    %v1605 = vpack.c.b16 %v1261, %v1253
    %v1606 = vpack.c.b16 %v1262, %v1254
    %v1607 = vpack.c.b16 %v1263, %v1255
    %v1608 = vpack.c.b16 %v1264, %v1256
    %v1609 = vpack.c.b16 %v1265, %v1257
    %v1610 = vpack.c.b16 %v1266, %v1258
    %v1611 = vpack.c.b16 %v1267, %v1259
    %v1612 = vpack.c.b16 %v1276, %v1268
    %v1613 = vpack.c.b16 %v1277, %v1269
    %v1614 = vpack.c.b16 %v1278, %v1270
    %v1615 = vpack.c.b16 %v1279, %v1271
    %v1616 = vpack.c.b16 %v1280, %v1272
    %v1617 = vpack.c.b16 %v1281, %v1273
    %v1618 = vpack.c.b16 %v1282, %v1274
    %v1619 = vpack.c.b16 %v1283, %v1275
    %v1620 = vpack.c.b16 %v1292, %v1284
    %v1621 = vpack.c.b16 %v1293, %v1285
    %v1622 = vpack.c.b16 %v1294, %v1286
    %v1623 = vpack.c.b16 %v1295, %v1287
    %v1624 = vpack.c.b16 %v1296, %v1288
    %v1625 = vpack.c.b16 %v1297, %v1289
    %v1626 = vpack.c.b16 %v1298, %v1290
    %v1627 = vpack.c.b16 %v1299, %v1291
    %v1628 = vpack.c.b16 %v1308, %v1300
    %v1629 = vpack.c.b16 %v1309, %v1301
    %v1630 = vpack.c.b16 %v1310, %v1302
    %v1631 = vpack.c.b16 %v1311, %v1303
    %v1632 = vpack.c.b16 %v1312, %v1304
    %v1633 = vpack.c.b16 %v1313, %v1305
    %v1634 = vpack.c.b16 %v1314, %v1306
    %v1635 = vpack.c.b16 %v1315, %v1307
    %v1636 = vpack.c.b16 %v1324, %v1316
    %v1637 = vpack.c.b16 %v1325, %v1317
    %v1638 = vpack.c.b16 %v1326, %v1318
    %v1639 = vpack.c.b16 %v1327, %v1319
    %v1640 = vpack.c.b16 %v1328, %v1320
    %v1641 = vpack.c.b16 %v1329, %v1321
    %v1642 = vpack.c.b16 %v1330, %v1322
    %v1643 = vpack.c.b16 %v1331, %v1323
    %v1644 = vpack.c.b16 %v1340, %v1332
    %v1645 = vpack.c.b16 %v1341, %v1333
    %v1646 = vpack.c.b16 %v1342, %v1334
    %v1647 = vpack.c.b16 %v1343, %v1335
    %v1648 = vpack.c.b16 %v1344, %v1336
    %v1649 = vpack.c.b16 %v1345, %v1337
    %v1650 = vpack.c.b16 %v1346, %v1338
    %v1651 = vpack.c.b16 %v1347, %v1339
    %v1652 = vpack.c.b16 %v1356, %v1348
    %v1653 = vpack.c.b16 %v1357, %v1349
    %v1654 = vpack.c.b16 %v1358, %v1350
    %v1655 = vpack.c.b16 %v1359, %v1351
    %v1656 = vpack.c.b16 %v1360, %v1352
    %v1657 = vpack.c.b16 %v1361, %v1353
    %v1658 = vpack.c.b16 %v1362, %v1354
    %v1659 = vpack.c.b16 %v1363, %v1355
    %v1660 = vpack.c.b16 %v1372, %v1364
    %v1661 = vpack.c.b16 %v1373, %v1365
    %v1662 = vpack.c.b16 %v1374, %v1366
    %v1663 = vpack.c.b16 %v1375, %v1367
    %v1664 = vpack.c.b16 %v1376, %v1368
    %v1665 = vpack.c.b16 %v1377, %v1369
    %v1666 = vpack.c.b16 %v1378, %v1370
    %v1667 = vpack.c.b16 %v1379, %v1371
    %v1668 = vpack.c.b16 %v1388, %v1380
    %v1669 = vpack.c.b16 %v1389, %v1381
    %v1670 = vpack.c.b16 %v1390, %v1382
    %v1671 = vpack.c.b16 %v1391, %v1383
    %v1672 = vpack.c.b16 %v1392, %v1384
    %v1673 = vpack.c.b16 %v1393, %v1385
    %v1674 = vpack.c.b16 %v1394, %v1386
    %v1675 = vpack.c.b16 %v1395, %v1387
    %v1676 = vpack.c.b16 %v1404, %v1396
    %v1677 = vpack.c.b16 %v1405, %v1397
    %v1678 = vpack.c.b16 %v1406, %v1398
    %v1679 = vpack.c.b16 %v1407, %v1399
    %v1680 = vpack.c.b16 %v1408, %v1400
    %v1681 = vpack.c.b16 %v1409, %v1401
    %v1682 = vpack.c.b16 %v1410, %v1402
    %v1683 = vpack.c.b16 %v1411, %v1403
    %v1684 = vpack.c.b16 %v1420, %v1412
    %v1685 = vpack.c.b16 %v1421, %v1413
    %v1686 = vpack.c.b16 %v1422, %v1414
    %v1687 = vpack.c.b16 %v1423, %v1415
    %v1688 = vpack.c.b16 %v1424, %v1416
    %v1689 = vpack.c.b16 %v1425, %v1417
    %v1690 = vpack.c.b16 %v1426, %v1418
    %v1691 = vpack.c.b16 %v1427, %v1419
    %v1692 = vpack.c.b16 %v1436, %v1428
    %v1693 = vpack.c.b16 %v1437, %v1429
    %v1694 = vpack.c.b16 %v1438, %v1430
    %v1695 = vpack.c.b16 %v1439, %v1431
    %v1696 = vpack.c.b16 %v1440, %v1432
    %v1697 = vpack.c.b16 %v1441, %v1433
    %v1698 = vpack.c.b16 %v1442, %v1434
    %v1699 = vpack.c.b16 %v1443, %v1435
    %1956 = vmatprep.subr.bf16.mxu0 %v1445
    %1957 = vmatpush1.bf16.msra.mxu0 %v1444
    %1958 = vmatprep.subr.bf16.mxu0 %v1453
    %1959 = vmatpush1.bf16.msra.mxu0 %v1452
    %1960 = vmatprep.subr.bf16.mxu0 %v1461
    %1961 = vmatpush1.bf16.msra.mxu0 %v1460
    %1962 = vmatprep.subr.bf16.mxu0 %v1469
    %1963 = vmatpush1.bf16.msra.mxu0 %v1468
    %1964 = vmatprep.subr.bf16.mxu0 %v1477
    %1965 = vmatpush1.bf16.msra.mxu0 %v1476
    %1966 = vmatprep.subr.bf16.mxu0 %v1485
    %1967 = vmatpush1.bf16.msra.mxu0 %v1484
    %1968 = vmatprep.subr.bf16.mxu0 %v1493
    %1969 = vmatpush1.bf16.msra.mxu0 %v1492
    %1970 = vmatprep.subr.bf16.mxu0 %v1501
    %1971 = vmatpush1.bf16.msra.mxu0 %v1500
    %1972 = vmatprep.subr.bf16.mxu0 %v1509
    %1973 = vmatpush1.bf16.msra.mxu0 %v1508
    %1974 = vmatprep.subr.bf16.mxu0 %v1517
    %1975 = vmatpush1.bf16.msra.mxu0 %v1516
    %1976 = vmatprep.subr.bf16.mxu0 %v1525
    %1977 = vmatpush1.bf16.msra.mxu0 %v1524
    %1978 = vmatprep.subr.bf16.mxu0 %v1533
    %1979 = vmatpush1.bf16.msra.mxu0 %v1532
    %1980 = vmatprep.subr.bf16.mxu0 %v1541
    %1981 = vmatpush1.bf16.msra.mxu0 %v1540
    %1982 = vmatprep.subr.bf16.mxu0 %v1549
    %1983 = vmatpush1.bf16.msra.mxu0 %v1548
    %1984 = vmatprep.subr.bf16.mxu0 %v1557
    %1985 = vmatpush1.bf16.msra.mxu0 %v1556
    %1986 = vmatprep.subr.bf16.mxu0 %v1565
    %1987 = vmatpush1.bf16.msra.mxu0 %v1564
    %1988 = vmatprep.mubr.bf16.mxu0 %v375
    %1989 = vmatmul.mubr.bf16.gmra.mrb[0].mxu0 %v374
    %v1990 = vpop.f32.mrb[0].mxu0
    %v1991 = vadd.f32 %v639, %v1990
    %v1992 = vpop.f32.mrb[0].mxu0
    %v1993 = vadd.f32 %v643, %v1992
    %v1994 = vpop.f32.mrb[0].mxu0
    %v1995 = vpop.f32.mrb[0].mxu0
    %1996 = vdwg.mxu0
    %1997 = vmatprep.subr.bf16.mxu0 %v1573
    %1998 = vmatpush1.bf16.msra.mxu0 %v1572
    %1999 = vmatprep.subr.bf16.mxu0 %v1581
    %2000 = vmatpush1.bf16.msra.mxu0 %v1580
    %2001 = vmatprep.subr.bf16.mxu0 %v1589
    %2002 = vmatpush1.bf16.msra.mxu0 %v1588
    %2003 = vmatprep.subr.bf16.mxu0 %v1597
    %2004 = vmatpush1.bf16.msra.mxu0 %v1596
    %2005 = vmatprep.subr.bf16.mxu0 %v1605
    %2006 = vmatpush1.bf16.msra.mxu0 %v1604
    %2007 = vmatprep.subr.bf16.mxu0 %v1613
    %2008 = vmatpush1.bf16.msra.mxu0 %v1612
    %2009 = vmatprep.subr.bf16.mxu0 %v1621
    %2010 = vmatpush1.bf16.msra.mxu0 %v1620
    %2011 = vmatprep.subr.bf16.mxu0 %v1629
    %2012 = vmatpush1.bf16.msra.mxu0 %v1628
    %2013 = vmatprep.subr.bf16.mxu0 %v1637
    %2014 = vmatpush1.bf16.msra.mxu0 %v1636
    %2015 = vmatprep.subr.bf16.mxu0 %v1645
    %2016 = vmatpush1.bf16.msra.mxu0 %v1644
    %2017 = vmatprep.subr.bf16.mxu0 %v1653
    %2018 = vmatpush1.bf16.msra.mxu0 %v1652
    %2019 = vmatprep.subr.bf16.mxu0 %v1661
    %2020 = vmatpush1.bf16.msra.mxu0 %v1660
    %2021 = vmatprep.subr.bf16.mxu0 %v1669
    %2022 = vmatpush1.bf16.msra.mxu0 %v1668
    %2023 = vmatprep.subr.bf16.mxu0 %v1677
    %2024 = vmatpush1.bf16.msra.mxu0 %v1676
    %2025 = vmatprep.subr.bf16.mxu0 %v1685
    %2026 = vmatpush1.bf16.msra.mxu0 %v1684
    %2027 = vmatprep.subr.bf16.mxu0 %v1693
    %2028 = vmatpush1.bf16.msra.mxu0 %v1692
    %2029 = vmatprep.mubr.bf16.mxu0 %v377
    %2030 = vmatmul.mubr.bf16.gmra.mrb[0].mxu0 %v376
    %v2031 = vpop.f32.mrb[0].mxu0
    %v2032 = vadd.f32 %v1991, %v2031
    %v2033 = vpop.f32.mrb[0].mxu0
    %v2034 = vadd.f32 %v1993, %v2033
    %v2035 = vpop.f32.mrb[0].mxu0
    %v2036 = vpop.f32.mrb[0].mxu0
    %2037 = vdwg.mxu0
    %2038 = vmatprep.subr.bf16.mxu0 %v1447
    %2039 = vmatpush1.bf16.msra.mxu0 %v1446
    %2040 = vmatprep.subr.bf16.mxu0 %v1455
    %2041 = vmatpush1.bf16.msra.mxu0 %v1454
    %2042 = vmatprep.subr.bf16.mxu0 %v1463
    %2043 = vmatpush1.bf16.msra.mxu0 %v1462
    %2044 = vmatprep.subr.bf16.mxu0 %v1471
    %2045 = vmatpush1.bf16.msra.mxu0 %v1470
    %2046 = vmatprep.subr.bf16.mxu0 %v1479
    %2047 = vmatpush1.bf16.msra.mxu0 %v1478
    %2048 = vmatprep.subr.bf16.mxu0 %v1487
    %2049 = vmatpush1.bf16.msra.mxu0 %v1486
    %2050 = vmatprep.subr.bf16.mxu0 %v1495
    %2051 = vmatpush1.bf16.msra.mxu0 %v1494
    %2052 = vmatprep.subr.bf16.mxu0 %v1503
    %2053 = vmatpush1.bf16.msra.mxu0 %v1502
    %2054 = vmatprep.subr.bf16.mxu0 %v1511
    %2055 = vmatpush1.bf16.msra.mxu0 %v1510
    %2056 = vmatprep.subr.bf16.mxu0 %v1519
    %2057 = vmatpush1.bf16.msra.mxu0 %v1518
    %2058 = vmatprep.subr.bf16.mxu0 %v1527
    %2059 = vmatpush1.bf16.msra.mxu0 %v1526
    %2060 = vmatprep.subr.bf16.mxu0 %v1535
    %2061 = vmatpush1.bf16.msra.mxu0 %v1534
    %2062 = vmatprep.subr.bf16.mxu0 %v1543
    %2063 = vmatpush1.bf16.msra.mxu0 %v1542
    %2064 = vmatprep.subr.bf16.mxu0 %v1551
    %2065 = vmatpush1.bf16.msra.mxu0 %v1550
    %2066 = vmatprep.subr.bf16.mxu0 %v1559
    %2067 = vmatpush1.bf16.msra.mxu0 %v1558
    %2068 = vmatprep.subr.bf16.mxu0 %v1567
    %2069 = vmatpush1.bf16.msra.mxu0 %v1566
    %2070 = vmatprep.mubr.bf16.mxu0 %v375
    %2071 = vmatmul.mubr.bf16.gmra.mrb[0].mxu0 %v374
    %v2072 = vpop.f32.mrb[0].mxu0
    %v2073 = vadd.f32 %v647, %v2072
    %v2074 = vpop.f32.mrb[0].mxu0
    %v2075 = vadd.f32 %v651, %v2074
    %v2076 = vpop.f32.mrb[0].mxu0
    %v2077 = vpop.f32.mrb[0].mxu0
    %2078 = vdwg.mxu0
    %2079 = vmatprep.subr.bf16.mxu0 %v1575
    %2080 = vmatpush1.bf16.msra.mxu0 %v1574
    %2081 = vmatprep.subr.bf16.mxu0 %v1583
    %2082 = vmatpush1.bf16.msra.mxu0 %v1582
    %2083 = vmatprep.subr.bf16.mxu0 %v1591
    %2084 = vmatpush1.bf16.msra.mxu0 %v1590
    %2085 = vmatprep.subr.bf16.mxu0 %v1599
    %2086 = vmatpush1.bf16.msra.mxu0 %v1598
    %2087 = vmatprep.subr.bf16.mxu0 %v1607
    %2088 = vmatpush1.bf16.msra.mxu0 %v1606
    %2089 = vmatprep.subr.bf16.mxu0 %v1615
    %2090 = vmatpush1.bf16.msra.mxu0 %v1614
    %2091 = vmatprep.subr.bf16.mxu0 %v1623
    %2092 = vmatpush1.bf16.msra.mxu0 %v1622
    %2093 = vmatprep.subr.bf16.mxu0 %v1631
    %2094 = vmatpush1.bf16.msra.mxu0 %v1630
    %2095 = vmatprep.subr.bf16.mxu0 %v1639
    %2096 = vmatpush1.bf16.msra.mxu0 %v1638
    %2097 = vmatprep.subr.bf16.mxu0 %v1647
    %2098 = vmatpush1.bf16.msra.mxu0 %v1646
    %2099 = vmatprep.subr.bf16.mxu0 %v1655
    %2100 = vmatpush1.bf16.msra.mxu0 %v1654
    %2101 = vmatprep.subr.bf16.mxu0 %v1663
    %2102 = vmatpush1.bf16.msra.mxu0 %v1662
    %2103 = vmatprep.subr.bf16.mxu0 %v1671
    %2104 = vmatpush1.bf16.msra.mxu0 %v1670
    %2105 = vmatprep.subr.bf16.mxu0 %v1679
    %2106 = vmatpush1.bf16.msra.mxu0 %v1678
    %2107 = vmatprep.subr.bf16.mxu0 %v1687
    %2108 = vmatpush1.bf16.msra.mxu0 %v1686
    %2109 = vmatprep.subr.bf16.mxu0 %v1695
    %2110 = vmatpush1.bf16.msra.mxu0 %v1694
    %2111 = vmatprep.mubr.bf16.mxu0 %v377
    %2112 = vmatmul.mubr.bf16.gmra.mrb[0].mxu0 %v376
    %v2113 = vpop.f32.mrb[0].mxu0
    %v2114 = vadd.f32 %v2073, %v2113
    %v2115 = vpop.f32.mrb[0].mxu0
    %v2116 = vadd.f32 %v2075, %v2115
    %v2117 = vpop.f32.mrb[0].mxu0
    %v2118 = vpop.f32.mrb[0].mxu0
    %2119 = vdwg.mxu0
    %2120 = vmatprep.subr.bf16.mxu0 %v1449
    %2121 = vmatpush1.bf16.msra.mxu0 %v1448
    %2122 = vmatprep.subr.bf16.mxu0 %v1457
    %2123 = vmatpush1.bf16.msra.mxu0 %v1456
    %2124 = vmatprep.subr.bf16.mxu0 %v1465
    %2125 = vmatpush1.bf16.msra.mxu0 %v1464
    %2126 = vmatprep.subr.bf16.mxu0 %v1473
    %2127 = vmatpush1.bf16.msra.mxu0 %v1472
    %2128 = vmatprep.subr.bf16.mxu0 %v1481
    %2129 = vmatpush1.bf16.msra.mxu0 %v1480
    %2130 = vmatprep.subr.bf16.mxu0 %v1489
    %2131 = vmatpush1.bf16.msra.mxu0 %v1488
    %2132 = vmatprep.subr.bf16.mxu0 %v1497
    %2133 = vmatpush1.bf16.msra.mxu0 %v1496
    %2134 = vmatprep.subr.bf16.mxu0 %v1505
    %2135 = vmatpush1.bf16.msra.mxu0 %v1504
    %2136 = vmatprep.subr.bf16.mxu0 %v1513
    %2137 = vmatpush1.bf16.msra.mxu0 %v1512
    %2138 = vmatprep.subr.bf16.mxu0 %v1521
    %2139 = vmatpush1.bf16.msra.mxu0 %v1520
    %2140 = vmatprep.subr.bf16.mxu0 %v1529
    %2141 = vmatpush1.bf16.msra.mxu0 %v1528
    %2142 = vmatprep.subr.bf16.mxu0 %v1537
    %2143 = vmatpush1.bf16.msra.mxu0 %v1536
    %2144 = vmatprep.subr.bf16.mxu0 %v1545
    %2145 = vmatpush1.bf16.msra.mxu0 %v1544
    %2146 = vmatprep.subr.bf16.mxu0 %v1553
    %2147 = vmatpush1.bf16.msra.mxu0 %v1552
    %2148 = vmatprep.subr.bf16.mxu0 %v1561
    %2149 = vmatpush1.bf16.msra.mxu0 %v1560
    %2150 = vmatprep.subr.bf16.mxu0 %v1569
    %2151 = vmatpush1.bf16.msra.mxu0 %v1568
    %2152 = vmatprep.mubr.bf16.mxu0 %v375
    %2153 = vmatmul.mubr.bf16.gmra.mrb[0].mxu0 %v374
    %v2154 = vpop.f32.mrb[0].mxu0
    %v2155 = vadd.f32 %v655, %v2154
    %v2156 = vpop.f32.mrb[0].mxu0
    %v2157 = vadd.f32 %v659, %v2156
    %v2158 = vpop.f32.mrb[0].mxu0
    %v2159 = vpop.f32.mrb[0].mxu0
    %2160 = vdwg.mxu0
    %2161 = vmatprep.subr.bf16.mxu0 %v1577
    %2162 = vmatpush1.bf16.msra.mxu0 %v1576
    %2163 = vmatprep.subr.bf16.mxu0 %v1585
    %2164 = vmatpush1.bf16.msra.mxu0 %v1584
    %2165 = vmatprep.subr.bf16.mxu0 %v1593
    %2166 = vmatpush1.bf16.msra.mxu0 %v1592
    %2167 = vmatprep.subr.bf16.mxu0 %v1601
    %2168 = vmatpush1.bf16.msra.mxu0 %v1600
    %2169 = vmatprep.subr.bf16.mxu0 %v1609
    %2170 = vmatpush1.bf16.msra.mxu0 %v1608
    %2171 = vmatprep.subr.bf16.mxu0 %v1617
    %2172 = vmatpush1.bf16.msra.mxu0 %v1616
    %2173 = vmatprep.subr.bf16.mxu0 %v1625
    %2174 = vmatpush1.bf16.msra.mxu0 %v1624
    %2175 = vmatprep.subr.bf16.mxu0 %v1633
    %2176 = vmatpush1.bf16.msra.mxu0 %v1632
    %2177 = vmatprep.subr.bf16.mxu0 %v1641
    %2178 = vmatpush1.bf16.msra.mxu0 %v1640
    %2179 = vmatprep.subr.bf16.mxu0 %v1649
    %2180 = vmatpush1.bf16.msra.mxu0 %v1648
    %2181 = vmatprep.subr.bf16.mxu0 %v1657
    %2182 = vmatpush1.bf16.msra.mxu0 %v1656
    %2183 = vmatprep.subr.bf16.mxu0 %v1665
    %2184 = vmatpush1.bf16.msra.mxu0 %v1664
    %2185 = vmatprep.subr.bf16.mxu0 %v1673
    %2186 = vmatpush1.bf16.msra.mxu0 %v1672
    %2187 = vmatprep.subr.bf16.mxu0 %v1681
    %2188 = vmatpush1.bf16.msra.mxu0 %v1680
    %2189 = vmatprep.subr.bf16.mxu0 %v1689
    %2190 = vmatpush1.bf16.msra.mxu0 %v1688
    %2191 = vmatprep.subr.bf16.mxu0 %v1697
    %2192 = vmatpush1.bf16.msra.mxu0 %v1696
    %2193 = vmatprep.mubr.bf16.mxu0 %v377
    %2194 = vmatmul.mubr.bf16.gmra.mrb[0].mxu0 %v376
    %v2195 = vpop.f32.mrb[0].mxu0
    %v2196 = vadd.f32 %v2155, %v2195
    %v2197 = vpop.f32.mrb[0].mxu0
    %v2198 = vadd.f32 %v2157, %v2197
    %v2199 = vpop.f32.mrb[0].mxu0
    %v2200 = vpop.f32.mrb[0].mxu0
    %2201 = vdwg.mxu0
    %2202 = vmatprep.subr.bf16.mxu0 %v1451
    %2203 = vmatpush1.bf16.msra.mxu0 %v1450
    %2204 = vmatprep.subr.bf16.mxu0 %v1459
    %2205 = vmatpush1.bf16.msra.mxu0 %v1458
    %2206 = vmatprep.subr.bf16.mxu0 %v1467
    %2207 = vmatpush1.bf16.msra.mxu0 %v1466
    %2208 = vmatprep.subr.bf16.mxu0 %v1475
    %2209 = vmatpush1.bf16.msra.mxu0 %v1474
    %2210 = vmatprep.subr.bf16.mxu0 %v1483
    %2211 = vmatpush1.bf16.msra.mxu0 %v1482
    %2212 = vmatprep.subr.bf16.mxu0 %v1491
    %2213 = vmatpush1.bf16.msra.mxu0 %v1490
    %2214 = vmatprep.subr.bf16.mxu0 %v1499
    %2215 = vmatpush1.bf16.msra.mxu0 %v1498
    %2216 = vmatprep.subr.bf16.mxu0 %v1507
    %2217 = vmatpush1.bf16.msra.mxu0 %v1506
    %2218 = vmatprep.subr.bf16.mxu0 %v1515
    %2219 = vmatpush1.bf16.msra.mxu0 %v1514
    %2220 = vmatprep.subr.bf16.mxu0 %v1523
    %2221 = vmatpush1.bf16.msra.mxu0 %v1522
    %2222 = vmatprep.subr.bf16.mxu0 %v1531
    %2223 = vmatpush1.bf16.msra.mxu0 %v1530
    %2224 = vmatprep.subr.bf16.mxu0 %v1539
    %2225 = vmatpush1.bf16.msra.mxu0 %v1538
    %2226 = vmatprep.subr.bf16.mxu0 %v1547
    %2227 = vmatpush1.bf16.msra.mxu0 %v1546
    %2228 = vmatprep.subr.bf16.mxu0 %v1555
    %2229 = vmatpush1.bf16.msra.mxu0 %v1554
    %2230 = vmatprep.subr.bf16.mxu0 %v1563
    %2231 = vmatpush1.bf16.msra.mxu0 %v1562
    %2232 = vmatprep.subr.bf16.mxu0 %v1571
    %2233 = vmatpush1.bf16.msra.mxu0 %v1570
    %2234 = vmatprep.mubr.bf16.mxu0 %v375
    %2235 = vmatmul.mubr.bf16.gmra.mrb[0].mxu0 %v374
    %v2236 = vpop.f32.mrb[0].mxu0
    %v2237 = vadd.f32 %v663, %v2236
    %v2238 = vpop.f32.mrb[0].mxu0
    %v2239 = vadd.f32 %v667, %v2238
    %v2240 = vpop.f32.mrb[0].mxu0
    %v2241 = vpop.f32.mrb[0].mxu0
    %2242 = vdwg.mxu0
    %2243 = vmatprep.subr.bf16.mxu0 %v1579
    %2244 = vmatpush1.bf16.msra.mxu0 %v1578
    %2245 = vmatprep.subr.bf16.mxu0 %v1587
    %2246 = vmatpush1.bf16.msra.mxu0 %v1586
    %2247 = vmatprep.subr.bf16.mxu0 %v1595
    %2248 = vmatpush1.bf16.msra.mxu0 %v1594
    %2249 = vmatprep.subr.bf16.mxu0 %v1603
    %2250 = vmatpush1.bf16.msra.mxu0 %v1602
    %2251 = vmatprep.subr.bf16.mxu0 %v1611
    %2252 = vmatpush1.bf16.msra.mxu0 %v1610
    %2253 = vmatprep.subr.bf16.mxu0 %v1619
    %2254 = vmatpush1.bf16.msra.mxu0 %v1618
    %2255 = vmatprep.subr.bf16.mxu0 %v1627
    %2256 = vmatpush1.bf16.msra.mxu0 %v1626
    %2257 = vmatprep.subr.bf16.mxu0 %v1635
    %2258 = vmatpush1.bf16.msra.mxu0 %v1634
    %2259 = vmatprep.subr.bf16.mxu0 %v1643
    %2260 = vmatpush1.bf16.msra.mxu0 %v1642
    %2261 = vmatprep.subr.bf16.mxu0 %v1651
    %2262 = vmatpush1.bf16.msra.mxu0 %v1650
    %2263 = vmatprep.subr.bf16.mxu0 %v1659
    %2264 = vmatpush1.bf16.msra.mxu0 %v1658
    %2265 = vmatprep.subr.bf16.mxu0 %v1667
    %2266 = vmatpush1.bf16.msra.mxu0 %v1666
    %2267 = vmatprep.subr.bf16.mxu0 %v1675
    %2268 = vmatpush1.bf16.msra.mxu0 %v1674
    %2269 = vmatprep.subr.bf16.mxu0 %v1683
    %2270 = vmatpush1.bf16.msra.mxu0 %v1682
    %2271 = vmatprep.subr.bf16.mxu0 %v1691
    %2272 = vmatpush1.bf16.msra.mxu0 %v1690
    %2273 = vmatprep.subr.bf16.mxu0 %v1699
    %2274 = vmatpush1.bf16.msra.mxu0 %v1698
    %2275 = vmatprep.mubr.bf16.mxu0 %v377
    %2276 = vmatmul.mubr.bf16.gmra.mrb[0].mxu0 %v376
    %v2277 = vpop.f32.mrb[0].mxu0
    %v2278 = vadd.f32 %v2237, %v2277
    %v2279 = vpop.f32.mrb[0].mxu0
    %v2280 = vadd.f32 %v2239, %v2279
    %v2281 = vpop.f32.mrb[0].mxu0
    %v2282 = vpop.f32.mrb[0].mxu0
    %2283 = vdwg.mxu0
    %v2284 = vsub.f32 0.0, %v2032
    %v2285 = vsub.f32 0.0, %v2034
    %v2286 = vsub.f32 0.0, %v2114
    %v2287 = vsub.f32 0.0, %v2116
    %v2288 = vsub.f32 0.0, %v2196
    %v2289 = vsub.f32 0.0, %v2198
    %v2290 = vsub.f32 0.0, %v2278
    %v2291 = vsub.f32 0.0, %v2280
    %v2292 = vmul.f32 %v2284, 1.442695
    %v2293 = vpow.pop %v2292
    %v2294 = vmul.f32 %v2285, 1.442695
    %v2295 = vpow.pop %v2294
    %v2296 = vmul.f32 %v2286, 1.442695
    %v2297 = vpow.pop %v2296
    %v2298 = vmul.f32 %v2287, 1.442695
    %v2299 = vpow.pop %v2298
    %v2300 = vmul.f32 %v2288, 1.442695
    %v2301 = vpow.pop %v2300
    %v2302 = vmul.f32 %v2289, 1.442695
    %v2303 = vpow.pop %v2302
    %v2304 = vmul.f32 %v2290, 1.442695
    %v2305 = vpow.pop %v2304
    %v2306 = vmul.f32 %v2291, 1.442695
    %v2307 = vpow.pop %v2306
    %v2308 = vadd.f32 %v2293, 1.0
    %v2309 = vadd.f32 %v2295, 1.0
    %v2310 = vadd.f32 %v2297, 1.0
    %v2311 = vadd.f32 %v2299, 1.0
    %v2312 = vadd.f32 %v2301, 1.0
    %v2313 = vadd.f32 %v2303, 1.0
    %v2314 = vadd.f32 %v2305, 1.0
    %v2315 = vadd.f32 %v2307, 1.0
    %v2316 = vrcp.pop %v2308
    %v2317 = vrcp.pop %v2309
    %v2318 = vrcp.pop %v2310
    %v2319 = vrcp.pop %v2311
    %v2320 = vrcp.pop %v2312
    %v2321 = vrcp.pop %v2313
    %v2322 = vrcp.pop %v2314
    %v2323 = vrcp.pop %v2315
    %2324 = vst [vmem:[#allocation10] sm:$0xff] %v2316
    %2325 = vst [vmem:[#allocation10 + $0x8] sm:$0xff] %v2317
    %2326 = vst [vmem:[#allocation10 + $0x10] sm:$0xff] %v2318
    %2327 = vst [vmem:[#allocation10 + $0x18] sm:$0xff] %v2319
    %2328 = vst [vmem:[#allocation10 + $0x20] sm:$0xff] %v2320
    %2329 = vst [vmem:[#allocation10 + $0x28] sm:$0xff] %v2321
    %2330 = vst [vmem:[#allocation10 + $0x30] sm:$0xff] %v2322
    %2331 = vst [vmem:[#allocation10 + $0x38] sm:$0xff] %v2323
    // Predicated region
    $region42: #{tpu_custom_call.1} parent=1 // pred_check
      _
    $region43: #{tpu_custom_call.1} parent=1 // pred_check_branch
      %2333 = sbr.rel (0) target = $region45
    $region44: #{tpu_custom_call.1} parent=1 // pred_region
      %s2335 = ssub.s32 1024, 1024
      %2336 = vsyncadd [#allocation4], %s2335
      %s2338 = sshll.u32 [#allocation10], 4
      %s2339 = int_to_ptr.vmem [resolvable:$true] %s2338
      %2341 = dma.vmem_to_hbm [thread:$0]  %s2339, 1024, %s6, [#allocation4]
    $region45: #{tpu_custom_call.1} parent=1 // pred_fallthru
      _
    // Predicated region
    $region46: #{tpu_custom_call.1} parent=1 // pred_check
      _
    $region47: #{tpu_custom_call.1} parent=1 // pred_check_branch
      %2343 = sbr.rel (0) target = $region49
    $region48: #{tpu_custom_call.1} parent=1 // pred_region
      %2344 = dma.done [#allocation4], 1024
    $region49: #{tpu_custom_call.1} parent=1 // pred_fallthru
      _
    %2345 = vsyncpa [#allocation3], 1
    %2346 = vsyncpa [#allocation6], 1
    %2347 = vsyncpa [#allocation9], 1
    %2348 = vsyncpa [#allocation4], 1

</llo_original>
